<compile_context>
chip_gen: v7x
topology: tpu7x:2x2x1
jax: 0.10.0
libtpu: 0.0.40
codegen_flags: <defaults>
</compile_context>

<pallas_src>
import functools
import math

import jax
import jax.numpy as jnp
from jax import lax
from jax.experimental import pallas as pl
from jax.experimental.pallas import tpu as pltpu


def _round_up(x, m):
    return ((x + m - 1) // m) * m


# ---------------------------------------------------------------------------
# Pallas kernel: one padded NHWC image -> one fused im2col GEMM on the MXU
# ---------------------------------------------------------------------------
def _conv2d_kernel(x_ref, w_ref, b_ref, o_ref, *, k, stride, Ho, Wo, Cin):
    """
    x_ref : (Hp, Wp, Cin)      spatially padded input image (batch dim squeezed)
    w_ref : (k*k*Cin, Cout_p)  weight, K rows ordered (kh, kw, cin)
    b_ref : (1, Cout_p)        bias (zero padded to Cout_p lanes)
    o_ref : (Ho*Wo, Cout_p)    flattened spatial x padded channels (lane dense)
    """
    taps = []
    for a in range(k):                      # static, unrolled loops over taps
        for b in range(k):
            if stride == 1:
                t = x_ref[a:a + Ho, b:b + Wo, :]
            else:
                t = x_ref[pl.ds(a, Ho, stride=stride),
                          pl.ds(b, Wo, stride=stride), :]
            taps.append(t)                  # (Ho, Wo, Cin)
    patches = taps[0] if len(taps) == 1 else jnp.concatenate(taps, axis=-1)
    patches = patches.reshape(Ho * Wo, k * k * Cin)   # single reshape (im2col)
    acc = jnp.dot(patches, w_ref[...], preferred_element_type=jnp.float32)
    acc = acc + b_ref[...]                            # (1, Cout_p) broadcast
    o_ref[...] = acc.astype(o_ref.dtype)


# ---------------------------------------------------------------------------
# Wrapper: equivalent of F.conv2d(x, w, bias, stride=stride, padding=padding)
# ---------------------------------------------------------------------------
def pallas_conv2d(x_nchw, weight_oihw, bias=None, *, stride=1, padding=0,
                  compute_dtype=None):
    N, Cin, H, W = x_nchw.shape
    Cout, Cin_w, k, k_w = weight_oihw.shape
    assert Cin_w == Cin and k == k_w
    Hp, Wp = H + 2 * padding, W + 2 * padding
    Ho = (Hp - k) // stride + 1
    Wo = (Wp - k) // stride + 1

    # Public API is NCHW (like the PyTorch module); kernel consumes padded NHWC.
    x_nhwc = jnp.transpose(x_nchw, (0, 2, 3, 1))
    if padding > 0:
        x_nhwc = jnp.pad(
            x_nhwc, ((0, 0), (padding, padding), (padding, padding), (0, 0)))

    # Weight -> (k*k*Cin, Cout): K ordered (kh, kw, cin) to match the kernel's
    # tap-concat order; pad Cout to a lane-dense multiple of 128.
    Cout_p = _round_up(Cout, 128)
    w2d = jnp.transpose(weight_oihw, (2, 3, 1, 0)).reshape(k * k * Cin, Cout)
    if Cout_p != Cout:
        w2d = jnp.pad(w2d, ((0, 0), (0, Cout_p - Cout)))
    b_vec = bias if bias is not None else jnp.zeros((Cout,), jnp.float32)
    b2 = jnp.pad(b_vec.astype(jnp.float32).reshape(1, Cout),
                 ((0, 0), (0, Cout_p - Cout)))

    if compute_dtype is not None:
        # Optional bf16 MXU inputs (f32 accumulate) for v6e/v7x; default stays f32
        # so the self-test can use a tight tolerance.
        x_nhwc = x_nhwc.astype(compute_dtype)
        w2d = w2d.astype(compute_dtype)

    kern = functools.partial(_conv2d_kernel, k=k, stride=stride,
                             Ho=Ho, Wo=Wo, Cin=Cin)

    flops = 2 * N * Ho * Wo * Cout * Cin * k * k
    bytes_accessed = int(x_nhwc.size * x_nhwc.dtype.itemsize
                         + w2d.size * w2d.dtype.itemsize
                         + N * Ho * Wo * Cout_p * 4)

    out2d = pl.pallas_call(
        kern,
        out_shape=jax.ShapeDtypeStruct((N, Ho * Wo, Cout_p), x_nchw.dtype),
        grid=(N,),
        in_specs=[
            pl.BlockSpec((None, Hp, Wp, Cin), lambda n: (n, 0, 0, 0)),
            pl.BlockSpec((k * k * Cin, Cout_p), lambda n: (0, 0)),
            pl.BlockSpec((1, Cout_p), lambda n: (0, 0)),
        ],
        out_specs=pl.BlockSpec((None, Ho * Wo, Cout_p), lambda n: (n, 0, 0)),
        compiler_params=pltpu.CompilerParams(
            dimension_semantics=("parallel",),
            vmem_limit_bytes=32 * 1024 * 1024),
        cost_estimate=pl.CostEstimate(flops=flops, transcendentals=0,
                                      bytes_accessed=bytes_accessed),
    )(x_nhwc, w2d, b2)

    out = out2d[:, :, :Cout].reshape(N, Ho, Wo, Cout)   # drop lane padding
    return jnp.transpose(out, (0, 3, 1, 2))             # back to NCHW


# ---------------------------------------------------------------------------
# DConv2d forward (mirrors the PyTorch module's branching)
# ---------------------------------------------------------------------------
def dconv2d_forward(x, params, *, stride=1):
    weight = params['weight']
    bias = params.get('bias', None)
    padding = weight.shape[-1] // 2
    if 'projection' in params:
        m = pallas_conv2d(x, weight, None, stride=stride, padding=padding)
        y = pallas_conv2d(m, params['projection'], bias, stride=1, padding=0)
    else:
        y = pallas_conv2d(x, weight, bias, stride=stride, padding=padding)
    if 'projection2' in params:
        y = pallas_conv2d(x, params['projection2'], None, stride=1, padding=0)
    return y


# ---------------------------------------------------------------------------
# Pure-JAX reference (lax.conv) for correctness checking
# ---------------------------------------------------------------------------
def _conv_ref(x, w, b, stride, padding):
    out = lax.conv_general_dilated(
        x, w, (stride, stride), [(padding, padding)] * 2,
        dimension_numbers=('NCHW', 'OIHW', 'NCHW'))
    if b is not None:
        out = out + b[None, :, None, None]
    return out


def reference_forward(x, params, *, stride=1):
    weight = params['weight']
    bias = params.get('bias', None)
    padding = weight.shape[-1] // 2
    if 'projection' in params:
        m = _conv_ref(x, weight, None, stride, padding)
        y = _conv_ref(m, params['projection'], bias, 1, 0)
    else:
        y = _conv_ref(x, weight, bias, stride, padding)
    if 'projection2' in params:
        y = _conv_ref(x, params['projection2'], None, 1, 0)
    return y


if __name__ == "__main__":
    N, Cin, H, W = 2, 4, 16, 16
    Cout, k = 8, 3
    Cproj = 16

    key = jax.random.PRNGKey(0)
    kx, kw, kb, kp, kpb = jax.random.split(key, 5)
    x = jax.random.normal(kx, (N, Cin, H, W), jnp.float32)
    weight = jax.random.normal(kw, (Cout, Cin, k, k), jnp.float32) / math.sqrt(Cin * k * k)
    bias = 0.1 * jax.random.normal(kb, (Cout,), jnp.float32)
    projection = jax.random.normal(kp, (Cproj, Cout, 1, 1), jnp.float32) / math.sqrt(Cout)
    proj_bias = 0.1 * jax.random.normal(kpb, (Cproj,), jnp.float32)

    fwd = jax.jit(dconv2d_forward, static_argnames=('stride',))
    ref = jax.jit(reference_forward, static_argnames=('stride',))

    def check(params, stride, expect_shape):
        y = jax.block_until_ready(fwd(x, params, stride=stride))
        y_ref = jax.block_until_ready(ref(x, params, stride=stride))
        assert y.shape == expect_shape, (y.shape, expect_shape)
        err = float(jnp.max(jnp.abs(y - y_ref)))
        assert jnp.allclose(y, y_ref, rtol=1e-3, atol=1e-3), err

    # 1) main path: conv(weight, bias), "same" padding, stride 1
    check(dict(weight=weight, bias=bias), 1, (N, Cout, H, W))
    # 2) stride-2 path
    check(dict(weight=weight, bias=bias), 2, (N, Cout, H // 2, W // 2))
    # 3) projection path: conv(weight) -> 1x1 conv(projection, bias)
    check(dict(weight=weight, bias=proj_bias, projection=projection), 1, (N, Cproj, H, W))

    print("KERNEL_OK")
</pallas_src>

<mosaic_0001>
module attributes {stable_mosaic.version = 11 : i64} {
  func.func @_conv2d_kernel(%arg0: i32, %arg1: memref<1x18x18x4xf32, #tpu.memory_space<vmem>>, %arg2: memref<36x128xf32, #tpu.memory_space<vmem>>, %arg3: memref<1x128xf32, #tpu.memory_space<vmem>>, %arg4: memref<1x256x128xf32, #tpu.memory_space<vmem>>) attributes {dimension_semantics = [#tpu.dimension_semantics<parallel>], iteration_bounds = array<i64: 2>, scalar_prefetch = 0 : i64, scratch_operands = 0 : i64, tpu.core_type = #tpu.core_type<tc>, window_params = [{transform_indices = @transform_0, window_bounds = array<i64: 1, 18, 18, 4>}, {pipeline_mode = #tpu.pipeline_mode<synchronous>, transform_indices = @transform_1, window_bounds = array<i64: 36, 128>}, {pipeline_mode = #tpu.pipeline_mode<synchronous>, transform_indices = @transform_2, window_bounds = array<i64: 1, 128>}, {transform_indices = @transform_3, window_bounds = array<i64: 1, 256, 128>}]} {
    %c0 = arith.constant 0 : index
    %c0_0 = arith.constant 0 : index
    %c0_1 = arith.constant 0 : index
    %c0_2 = arith.constant 0 : index
    %0 = vector.load %arg1[%c0, %c0_0, %c0_1, %c0_2] : memref<1x18x18x4xf32, #tpu.memory_space<vmem>>, vector<1x16x16x4xf32>
    %1 = vector.shape_cast %0 : vector<1x16x16x4xf32> to vector<16x16x4xf32>
    %c0_3 = arith.constant 0 : index
    %c0_4 = arith.constant 0 : index
    %c1 = arith.constant 1 : index
    %c0_5 = arith.constant 0 : index
    %2 = vector.load %arg1[%c0_3, %c0_4, %c1, %c0_5] : memref<1x18x18x4xf32, #tpu.memory_space<vmem>>, vector<1x16x16x4xf32>
    %3 = vector.shape_cast %2 : vector<1x16x16x4xf32> to vector<16x16x4xf32>
    %c0_6 = arith.constant 0 : index
    %c0_7 = arith.constant 0 : index
    %c2 = arith.constant 2 : index
    %c0_8 = arith.constant 0 : index
    %4 = vector.load %arg1[%c0_6, %c0_7, %c2, %c0_8] : memref<1x18x18x4xf32, #tpu.memory_space<vmem>>, vector<1x16x16x4xf32>
    %5 = vector.shape_cast %4 : vector<1x16x16x4xf32> to vector<16x16x4xf32>
    %c0_9 = arith.constant 0 : index
    %c1_10 = arith.constant 1 : index
    %c0_11 = arith.constant 0 : index
    %c0_12 = arith.constant 0 : index
    %6 = vector.load %arg1[%c0_9, %c1_10, %c0_11, %c0_12] : memref<1x18x18x4xf32, #tpu.memory_space<vmem>>, vector<1x16x16x4xf32>
    %7 = vector.shape_cast %6 : vector<1x16x16x4xf32> to vector<16x16x4xf32>
    %c0_13 = arith.constant 0 : index
    %c1_14 = arith.constant 1 : index
    %c1_15 = arith.constant 1 : index
    %c0_16 = arith.constant 0 : index
    %8 = vector.load %arg1[%c0_13, %c1_14, %c1_15, %c0_16] : memref<1x18x18x4xf32, #tpu.memory_space<vmem>>, vector<1x16x16x4xf32>
    %9 = vector.shape_cast %8 : vector<1x16x16x4xf32> to vector<16x16x4xf32>
    %c0_17 = arith.constant 0 : index
    %c1_18 = arith.constant 1 : index
    %c2_19 = arith.constant 2 : index
    %c0_20 = arith.constant 0 : index
    %10 = vector.load %arg1[%c0_17, %c1_18, %c2_19, %c0_20] : memref<1x18x18x4xf32, #tpu.memory_space<vmem>>, vector<1x16x16x4xf32>
    %11 = vector.shape_cast %10 : vector<1x16x16x4xf32> to vector<16x16x4xf32>
    %c0_21 = arith.constant 0 : index
    %c2_22 = arith.constant 2 : index
    %c0_23 = arith.constant 0 : index
    %c0_24 = arith.constant 0 : index
    %12 = vector.load %arg1[%c0_21, %c2_22, %c0_23, %c0_24] : memref<1x18x18x4xf32, #tpu.memory_space<vmem>>, vector<1x16x16x4xf32>
    %13 = vector.shape_cast %12 : vector<1x16x16x4xf32> to vector<16x16x4xf32>
    %c0_25 = arith.constant 0 : index
    %c2_26 = arith.constant 2 : index
    %c1_27 = arith.constant 1 : index
    %c0_28 = arith.constant 0 : index
    %14 = vector.load %arg1[%c0_25, %c2_26, %c1_27, %c0_28] : memref<1x18x18x4xf32, #tpu.memory_space<vmem>>, vector<1x16x16x4xf32>
    %15 = vector.shape_cast %14 : vector<1x16x16x4xf32> to vector<16x16x4xf32>
    %c0_29 = arith.constant 0 : index
    %c2_30 = arith.constant 2 : index
    %c2_31 = arith.constant 2 : index
    %c0_32 = arith.constant 0 : index
    %16 = vector.load %arg1[%c0_29, %c2_30, %c2_31, %c0_32] : memref<1x18x18x4xf32, #tpu.memory_space<vmem>>, vector<1x16x16x4xf32>
    %17 = vector.shape_cast %16 : vector<1x16x16x4xf32> to vector<16x16x4xf32>
    %18 = tpu.concatenate %1, %3, %5, %7, %9, %11, %13, %15, %17 in 2 : vector<16x16x4xf32>, vector<16x16x4xf32>, vector<16x16x4xf32>, vector<16x16x4xf32>, vector<16x16x4xf32>, vector<16x16x4xf32>, vector<16x16x4xf32>, vector<16x16x4xf32>, vector<16x16x4xf32> -> vector<16x16x36xf32>
    %19 = vector.shape_cast %18 : vector<16x16x36xf32> to vector<256x36xf32>
    %c0_33 = arith.constant 0 : index
    %c0_34 = arith.constant 0 : index
    %20 = vector.load %arg2[%c0_33, %c0_34] : memref<36x128xf32, #tpu.memory_space<vmem>>, vector<36x128xf32>
    %cst = arith.constant dense<0.000000e+00> : vector<256x128xf32>
    %21 = tpu.matmul %19, %20, %cst {dimension_numbers = #tpu.dot_dimension_numbers<[1], [0], [0], [1], [0, 0, 1, 1], [], []>} : vector<256x36xf32>, vector<36x128xf32>, vector<256x128xf32> -> vector<256x128xf32>
    %c0_35 = arith.constant 0 : index
    %c0_36 = arith.constant 0 : index
    %22 = vector.load %arg3[%c0_35, %c0_36] : memref<1x128xf32, #tpu.memory_space<vmem>>, vector<1x128xf32>
    %23 = vector.broadcast %22 : vector<1x128xf32> to vector<256x128xf32>
    %24 = arith.addf %21, %23 : vector<256x128xf32>
    %c0_37 = arith.constant 0 : index
    %c0_38 = arith.constant 0 : index
    %c0_39 = arith.constant 0 : index
    %25 = vector.load %arg4[%c0_37, %c0_38, %c0_39] : memref<1x256x128xf32, #tpu.memory_space<vmem>>, vector<1x256x128xf32>
    %26 = vector.shape_cast %25 : vector<1x256x128xf32> to vector<256x128xf32>
    %27 = vector.shape_cast %24 : vector<256x128xf32> to vector<1x256x128xf32>
    tpu.vector_store %arg4[%c0_37, %c0_38, %c0_39], %27 {strides = array<i32>} : memref<1x256x128xf32, #tpu.memory_space<vmem>>, vector<1x256x128xf32>,
    return
  }
  func.func @transform_0(%arg0: i32) -> (i32, i32, i32, i32) {
    %c0_i32 = arith.constant 0 : i32
    %c0_i32_0 = arith.constant 0 : i32
    %c0_i32_1 = arith.constant 0 : i32
    %c0_i32_2 = arith.constant 0 : i32
    return %arg0, %c0_i32, %c0_i32_0, %c0_i32_1 : i32, i32, i32, i32
  }
  func.func @transform_1(%arg0: i32) -> (i32, i32) {
    %c0_i32 = arith.constant 0 : i32
    %c0_i32_0 = arith.constant 0 : i32
    %c0_i32_1 = arith.constant 0 : i32
    return %c0_i32, %c0_i32_0 : i32, i32
  }
  func.func @transform_2(%arg0: i32) -> (i32, i32) {
    %c0_i32 = arith.constant 0 : i32
    %c0_i32_0 = arith.constant 0 : i32
    %c0_i32_1 = arith.constant 0 : i32
    return %c0_i32, %c0_i32_0 : i32, i32
  }
  func.func @transform_3(%arg0: i32) -> (i32, i32, i32) {
    %c0_i32 = arith.constant 0 : i32
    %c0_i32_0 = arith.constant 0 : i32
    %c0_i32_1 = arith.constant 0 : i32
    return %arg0, %c0_i32, %c0_i32_0 : i32, i32, i32
  }
}

</mosaic_0001>

<llo_original>
// kernel: dconv2d_forward.1
$region0: #{dconv2d_forward.1}
  #allocation0 [shape = 'u32[]', space=smem, size = 0x4, offset = 0x4, fixed_abs, tag = 'smem constant byte address 0x4 - core index']
  #allocation1 [shape = 'u32[144,128]{1,0:T(1,128)}', space=vmem, size = 0x12000, scoped, tag = 'internal scratch']
  %s0 = inlined_call_operand.vmem [shape: f32[2,18,18,4], index: 0, kind: input, shape index: {}]
  %s1 = inlined_call_operand.vmem [shape: f32[36,128], index: 1, kind: input, shape index: {}]
  %s2 = inlined_call_operand.vmem [shape: f32[1,128], index: 2, kind: input, shape index: {}]
  %s3 = inlined_call_operand.vmem [shape: f32[2,256,128], index: 3, kind: output, shape index: {}]
  %s4 = sld [smem:[#allocation0]]
  $region45: #{dconv2d_forward.1} parent=0
    _
  %s6 = ssub.s32 1, %s4
  %s7 = scalar_select 0, %s6, %s4
  loop: start=0, step=1, limit=4
  $region2: #{dconv2d_forward.1} parent=0 // loop_pre_header
    _
  $region3: #{dconv2d_forward.1} parent=0 // loop_header
    %s9 = sphi 0, %s13
    %p10 = scmp.ge.s32.totalorder %s9, 4
    %s19 = sphi 0, %s21
    %s22 = sphi 0, %s19
    %s23 = sphi 0, %s22
    %s39 = sphi 0, %s23
    %s43 = sphi 0, %s43
    %s45 = sphi 0, %s43
    %s46 = sphi 0, %s45
    %s60 = sphi 0, %s46
    %s64 = sphi 0, %s64
    %s66 = sphi 0, %s64
    %s67 = sphi 0, %s66
    %s81 = sphi 0, %s67
    %s87 = sphi 0, %s89
    %s90 = sphi 0, %s87
    %s91 = sphi 0, %s90
    %s107 = sphi 0, %s91
  $region4: #{dconv2d_forward.1} parent=0 // loop_header_branch
    %12 = sbr.rel (%p10) target = $region8
  $region5: #{dconv2d_forward.1} parent=0 // loop_body
    %s14 = ssub.s32 %s9, 1
    %s15 = ssub.s32 %s9, 2
    %s16 = sadd.s32 %s9, 1
    %s17 = ssub.s32 %s9, %s16
    %p18 = scmp.eq.s32.totalorder %s17, 0
    %s20 = sadd.s32 %s19, 1
    %s21 = scalar_select %p18, %s19, %s20
    %p24 = pneg %p18
    %p25 = scmp.eq.s32.totalorder %s9, 1
    %p26 = por %p24, %p25
    %p27 = scmp.ne.s32.totalorder %s19, %s22
    %p28 = scmp.eq.s32.totalorder %s9, 0
    %p29 = por %p27, %p28
    %p30 = scmp.ne.s32.totalorder %s19, %s22
    %p31 = scmp.eq.s32.totalorder %s14, 1
    %p32 = por %p30, %p31
    %p33 = scmp.ne.s32.totalorder %s22, %s23
    %p34 = scmp.eq.s32.totalorder %s14, 0
    %p35 = por %p33, %p34
    %p36 = scmp.ne.s32.totalorder %s22, %s23
    %p37 = scmp.eq.s32.totalorder %s15, 1
    %p38 = por %p36, %p37
    %p40 = scmp.ne.s32.totalorder %s23, %s39
    %p41 = scmp.eq.s32.totalorder %s15, 0
    %p42 = por %p40, %p41
    %s44 = sadd.s32 %s43, 1
    %p47 = scmp.eq.s32.totalorder %s9, 1
    %p48 = scmp.ne.s32.totalorder %s43, %s45
    %p49 = scmp.eq.s32.totalorder %s9, 0
    %p50 = por %p48, %p49
    %p51 = scmp.ne.s32.totalorder %s43, %s45
    %p52 = scmp.eq.s32.totalorder %s14, 1
    %p53 = por %p51, %p52
    %p54 = scmp.ne.s32.totalorder %s45, %s46
    %p55 = scmp.eq.s32.totalorder %s14, 0
    %p56 = por %p54, %p55
    %p57 = scmp.ne.s32.totalorder %s45, %s46
    %p58 = scmp.eq.s32.totalorder %s15, 1
    %p59 = por %p57, %p58
    %p61 = scmp.ne.s32.totalorder %s46, %s60
    %p62 = scmp.eq.s32.totalorder %s15, 0
    %p63 = por %p61, %p62
    %s65 = sadd.s32 %s64, 1
    %p68 = scmp.eq.s32.totalorder %s9, 1
    %p69 = scmp.ne.s32.totalorder %s64, %s66
    %p70 = scmp.eq.s32.totalorder %s9, 0
    %p71 = por %p69, %p70
    %p72 = scmp.ne.s32.totalorder %s64, %s66
    %p73 = scmp.eq.s32.totalorder %s14, 1
    %p74 = por %p72, %p73
    %p75 = scmp.ne.s32.totalorder %s66, %s67
    %p76 = scmp.eq.s32.totalorder %s14, 0
    %p77 = por %p75, %p76
    %p78 = scmp.ne.s32.totalorder %s66, %s67
    %p79 = scmp.eq.s32.totalorder %s15, 1
    %p80 = por %p78, %p79
    %p82 = scmp.ne.s32.totalorder %s67, %s81
    %p83 = scmp.eq.s32.totalorder %s15, 0
    %p84 = por %p82, %p83
    %s85 = ssub.s32 %s9, %s16
    %p86 = scmp.eq.s32.totalorder %s85, 0
    %s88 = sadd.s32 %s87, 1
    %s89 = scalar_select %p86, %s87, %s88
    %p92 = pneg %p86
    %p93 = scmp.eq.s32.totalorder %s9, 1
    %p94 = por %p92, %p93
    %p95 = scmp.ne.s32.totalorder %s87, %s90
    %p96 = scmp.eq.s32.totalorder %s9, 0
    %p97 = por %p95, %p96
    %p98 = scmp.ne.s32.totalorder %s87, %s90
    %p99 = scmp.eq.s32.totalorder %s14, 1
    %p100 = por %p98, %p99
    %p101 = scmp.ne.s32.totalorder %s90, %s91
    %p102 = scmp.eq.s32.totalorder %s14, 0
    %p103 = por %p101, %p102
    %p104 = scmp.ne.s32.totalorder %s90, %s91
    %p105 = scmp.eq.s32.totalorder %s15, 1
    %p106 = por %p104, %p105
    %p108 = scmp.ne.s32.totalorder %s91, %s107
    %p109 = scmp.eq.s32.totalorder %s15, 0
    %p110 = por %p108, %p109
    %p111 = scmp.le.s32.totalorder 1, %s9
    %p112 = scmp.lt.s32.totalorder %s9, 3
    %p113 = pnand %p111, %p112
    %p114 = pneg %p113
    // Predicated region
    $region9: #{dconv2d_forward.1} parent=5 // pred_check
      _
    $region10: #{dconv2d_forward.1} parent=5 // pred_check_branch
      %116 = sbr.rel (%p113) target = $region12
    $region11: #{dconv2d_forward.1} parent=5 // pred_region
      %s117 = ssub.s32 %s9, 1
      // Predicated region
      $region13: #{dconv2d_forward.1} parent=11 // pred_check
        %p118 = pneg %p56
      $region14: #{dconv2d_forward.1} parent=11 // pred_check_branch
        %120 = sbr.rel (%p118) target = $region16
      $region15: #{dconv2d_forward.1} parent=11 // pred_region
        _
      $region16: #{dconv2d_forward.1} parent=11 // pred_fallthru
        _
      // Predicated region
      $region17: #{dconv2d_forward.1} parent=11 // pred_check
        %p121 = pneg %p77
      $region18: #{dconv2d_forward.1} parent=11 // pred_check_branch
        %123 = sbr.rel (%p121) target = $region20
      $region19: #{dconv2d_forward.1} parent=11 // pred_region
        _
      $region20: #{dconv2d_forward.1} parent=11 // pred_fallthru
        _
    $region12: #{dconv2d_forward.1} parent=5 // pred_fallthru
      _
    %p124 = scmp.lt.s32.totalorder %s9, 2
    // Predicated region
    $region21: #{dconv2d_forward.1} parent=5 // pred_check
      %p125 = pneg %p124
    $region22: #{dconv2d_forward.1} parent=5 // pred_check_branch
      %127 = sbr.rel (%p125) target = $region24
    $region23: #{dconv2d_forward.1} parent=5 // pred_region
      // Predicated region
      $region25: #{dconv2d_forward.1} parent=23 // pred_check
        %p128 = pneg %p29
      $region26: #{dconv2d_forward.1} parent=23 // pred_check_branch
        %130 = sbr.rel (%p128) target = $region28
      $region27: #{dconv2d_forward.1} parent=23 // pred_region
        %p131 = scmp.lt.s32.totalorder %s9, 1
        %s132 = scalar_select %p131, %s9, 1
        %s133 = smul.addr %s132, 54
        %s134 = smul.addr %s133, 8
        %s135 = scalar_lea.vmem %s0, %s134
      $region28: #{dconv2d_forward.1} parent=23 // pred_fallthru
        _
    $region24: #{dconv2d_forward.1} parent=5 // pred_fallthru
      _
    %p136 = scmp.le.s32.totalorder 1, %s9
    %p137 = scmp.lt.s32.totalorder %s9, 3
    %p138 = pnand %p136, %p137
    %p139 = pneg %p138
    // Predicated region
    $region29: #{dconv2d_forward.1} parent=5 // pred_check
      _
    $region30: #{dconv2d_forward.1} parent=5 // pred_check_branch
      %141 = sbr.rel (%p138) target = $region32
    $region31: #{dconv2d_forward.1} parent=5 // pred_region
      %s142 = ssub.s32 %s9, 1
      %p143 = scmp.lt.s32.totalorder %s14, 1
      %s144 = scalar_select %p143, %s14, 1
      %s145 = smul.addr %s144, 54
      %s146 = smul.addr %s145, 8
      %s147 = scalar_lea.vmem %s0, %s146
      %p148 = pneg %p35
      %p149 = pneg %p32
      %p150 = pneg %p56
      %p151 = pneg %p53
      %p152 = pneg %p77
      %p153 = pneg %p74
      %p154 = pneg %p103
      %p155 = pneg %p100
      %p156 = scmp.lt.s32.totalorder %s14, 1
      %s157 = scalar_select %p156, %s14, 1
      %s158 = smul.addr %s157, 32
      %s159 = smul.addr %s158, 8
      %s160 = scalar_lea.vmem %s3, %s159
      %p161 = scmp.lt.s32.totalorder %s14, 1
      %s162 = scalar_select %p161, %s14, 1
      %s163 = smul.addr %s162, 54
      %s164 = smul.addr %s163, 8
      %s165 = scalar_lea.vmem %s0, %s164
      %p166 = scmp.lt.s32.totalorder %s14, 1
      %s167 = scalar_select %p166, %s14, 1
      %s168 = smul.addr %s167, 32
      %s169 = smul.addr %s168, 8
      %s170 = scalar_lea.vmem %s3, %s169
      %v171 = vld [vmem:[%s165] sm:$0xff]
      %v172 = vld [vmem:[%s165 + $0x8] sm:$0xff]
      %v173 = vld [vmem:[%s165 + $0x18] sm:$0xff]
      %v174 = vld [vmem:[%s165 + $0x20] sm:$0xff]
      %v175 = vld [vmem:[%s165 + $0x30] sm:$0xff]
      %v176 = vld [vmem:[%s165 + $0x38] sm:$0xff]
      %v177 = vld [vmem:[%s165 + $0x48] sm:$0xff]
      %v178 = vld [vmem:[%s165 + $0x50] sm:$0xff]
      %v179 = vld [vmem:[%s165 + $0x60] sm:$0xff]
      %v180 = vld [vmem:[%s165 + $0x68] sm:$0xff]
      %v181 = vld [vmem:[%s165 + $0x78] sm:$0xff]
      %v182 = vld [vmem:[%s165 + $0x80] sm:$0xff]
      %v183 = vld [vmem:[%s165 + $0x90] sm:$0xff]
      %v184 = vld [vmem:[%s165 + $0x98] sm:$0xff]
      %v185 = vld [vmem:[%s165 + $0xa8] sm:$0xff]
      %v186 = vld [vmem:[%s165 + $0xb0] sm:$0xff]
      %v187 = vld [vmem:[%s165 + $0xc0] sm:$0xff]
      %v188 = vld [vmem:[%s165 + $0xc8] sm:$0xff]
      %v189 = vld [vmem:[%s165 + $0xd8] sm:$0xff]
      %v190 = vld [vmem:[%s165 + $0xe0] sm:$0xff]
      %v191 = vld [vmem:[%s165 + $0xf0] sm:$0xff]
      %v192 = vld [vmem:[%s165 + $0xf8] sm:$0xff]
      %v193 = vld [vmem:[%s165 + $0x108] sm:$0xff]
      %v194 = vld [vmem:[%s165 + $0x110] sm:$0xff]
      %v195 = vld [vmem:[%s165 + $0x120] sm:$0xff]
      %v196 = vld [vmem:[%s165 + $0x128] sm:$0xff]
      %v197 = vld [vmem:[%s165 + $0x138] sm:$0xff]
      %v198 = vld [vmem:[%s165 + $0x140] sm:$0xff]
      %v199 = vld [vmem:[%s165 + $0x150] sm:$0xff]
      %v200 = vld [vmem:[%s165 + $0x158] sm:$0xff]
      %v201 = vld [vmem:[%s165 + $0x168] sm:$0xff]
      %v202 = vld [vmem:[%s165 + $0x170] sm:$0xff]
      %v203 = vld [vmem:[%s165 + $0x1] sm:$0xff]
      %v204 = vld [vmem:[%s165 + $0x9] sm:$0xff]
      %v205 = vld [vmem:[%s165 + $0x19] sm:$0xff]
      %v206 = vld [vmem:[%s165 + $0x21] sm:$0xff]
      %v207 = vld [vmem:[%s165 + $0x31] sm:$0xff]
      %v208 = vld [vmem:[%s165 + $0x39] sm:$0xff]
      %v209 = vld [vmem:[%s165 + $0x49] sm:$0xff]
      %v210 = vld [vmem:[%s165 + $0x51] sm:$0xff]
      %v211 = vld [vmem:[%s165 + $0x61] sm:$0xff]
      %v212 = vld [vmem:[%s165 + $0x69] sm:$0xff]
      %v213 = vld [vmem:[%s165 + $0x79] sm:$0xff]
      %v214 = vld [vmem:[%s165 + $0x81] sm:$0xff]
      %v215 = vld [vmem:[%s165 + $0x91] sm:$0xff]
      %v216 = vld [vmem:[%s165 + $0x99] sm:$0xff]
      %v217 = vld [vmem:[%s165 + $0xa9] sm:$0xff]
      %v218 = vld [vmem:[%s165 + $0xb1] sm:$0xff]
      %v219 = vld [vmem:[%s165 + $0xc1] sm:$0xff]
      %v220 = vld [vmem:[%s165 + $0xc9] sm:$0xff]
      %v221 = vld [vmem:[%s165 + $0xd9] sm:$0xff]
      %v222 = vld [vmem:[%s165 + $0xe1] sm:$0xff]
      %v223 = vld [vmem:[%s165 + $0xf1] sm:$0xff]
      %v224 = vld [vmem:[%s165 + $0xf9] sm:$0xff]
      %v225 = vld [vmem:[%s165 + $0x109] sm:$0xff]
      %v226 = vld [vmem:[%s165 + $0x111] sm:$0xff]
      %v227 = vld [vmem:[%s165 + $0x121] sm:$0xff]
      %v228 = vld [vmem:[%s165 + $0x129] sm:$0xff]
      %v229 = vld [vmem:[%s165 + $0x139] sm:$0xff]
      %v230 = vld [vmem:[%s165 + $0x141] sm:$0xff]
      %v231 = vld [vmem:[%s165 + $0x151] sm:$0xff]
      %v232 = vld [vmem:[%s165 + $0x159] sm:$0xff]
      %v233 = vld [vmem:[%s165 + $0x169] sm:$0xff]
      %v234 = vld [vmem:[%s165 + $0x171] sm:$0xff]
      %v235 = vld [vmem:[%s165 + $0x2] sm:$0xff]
      %v236 = vld [vmem:[%s165 + $0xa] sm:$0xff]
      %v237 = vld [vmem:[%s165 + $0x1a] sm:$0xff]
      %v238 = vld [vmem:[%s165 + $0x22] sm:$0xff]
      %v239 = vld [vmem:[%s165 + $0x32] sm:$0xff]
      %v240 = vld [vmem:[%s165 + $0x3a] sm:$0xff]
      %v241 = vld [vmem:[%s165 + $0x4a] sm:$0xff]
      %v242 = vld [vmem:[%s165 + $0x52] sm:$0xff]
      %v243 = vld [vmem:[%s165 + $0x62] sm:$0xff]
      %v244 = vld [vmem:[%s165 + $0x6a] sm:$0xff]
      %v245 = vld [vmem:[%s165 + $0x7a] sm:$0xff]
      %v246 = vld [vmem:[%s165 + $0x82] sm:$0xff]
      %v247 = vld [vmem:[%s165 + $0x92] sm:$0xff]
      %v248 = vld [vmem:[%s165 + $0x9a] sm:$0xff]
      %v249 = vld [vmem:[%s165 + $0xaa] sm:$0xff]
      %v250 = vld [vmem:[%s165 + $0xb2] sm:$0xff]
      %v251 = vld [vmem:[%s165 + $0xc2] sm:$0xff]
      %v252 = vld [vmem:[%s165 + $0xca] sm:$0xff]
      %v253 = vld [vmem:[%s165 + $0xda] sm:$0xff]
      %v254 = vld [vmem:[%s165 + $0xe2] sm:$0xff]
      %v255 = vld [vmem:[%s165 + $0xf2] sm:$0xff]
      %v256 = vld [vmem:[%s165 + $0xfa] sm:$0xff]
      %v257 = vld [vmem:[%s165 + $0x10a] sm:$0xff]
      %v258 = vld [vmem:[%s165 + $0x112] sm:$0xff]
      %v259 = vld [vmem:[%s165 + $0x122] sm:$0xff]
      %v260 = vld [vmem:[%s165 + $0x12a] sm:$0xff]
      %v261 = vld [vmem:[%s165 + $0x13a] sm:$0xff]
      %v262 = vld [vmem:[%s165 + $0x142] sm:$0xff]
      %v263 = vld [vmem:[%s165 + $0x152] sm:$0xff]
      %v264 = vld [vmem:[%s165 + $0x15a] sm:$0xff]
      %v265 = vld [vmem:[%s165 + $0x16a] sm:$0xff]
      %v266 = vld [vmem:[%s165 + $0x172] sm:$0xff]
      %s267 = scalar_lea.vmem %s165, 24
      %v268 = vld [vmem:[%s267] sm:$0xff]
      %v269 = vld [vmem:[%s267 + $0x8] sm:$0xff]
      %v270 = vld [vmem:[%s267 + $0x18] sm:$0xff]
      %v271 = vld [vmem:[%s267 + $0x20] sm:$0xff]
      %v272 = vld [vmem:[%s267 + $0x30] sm:$0xff]
      %v273 = vld [vmem:[%s267 + $0x38] sm:$0xff]
      %v274 = vld [vmem:[%s267 + $0x48] sm:$0xff]
      %v275 = vld [vmem:[%s267 + $0x50] sm:$0xff]
      %v276 = vld [vmem:[%s267 + $0x60] sm:$0xff]
      %v277 = vld [vmem:[%s267 + $0x68] sm:$0xff]
      %v278 = vld [vmem:[%s267 + $0x78] sm:$0xff]
      %v279 = vld [vmem:[%s267 + $0x80] sm:$0xff]
      %v280 = vld [vmem:[%s267 + $0x90] sm:$0xff]
      %v281 = vld [vmem:[%s267 + $0x98] sm:$0xff]
      %v282 = vld [vmem:[%s267 + $0xa8] sm:$0xff]
      %v283 = vld [vmem:[%s267 + $0xb0] sm:$0xff]
      %v284 = vld [vmem:[%s267 + $0xc0] sm:$0xff]
      %v285 = vld [vmem:[%s267 + $0xc8] sm:$0xff]
      %v286 = vld [vmem:[%s267 + $0xd8] sm:$0xff]
      %v287 = vld [vmem:[%s267 + $0xe0] sm:$0xff]
      %v288 = vld [vmem:[%s267 + $0xf0] sm:$0xff]
      %v289 = vld [vmem:[%s267 + $0xf8] sm:$0xff]
      %v290 = vld [vmem:[%s267 + $0x108] sm:$0xff]
      %v291 = vld [vmem:[%s267 + $0x110] sm:$0xff]
      %v292 = vld [vmem:[%s267 + $0x120] sm:$0xff]
      %v293 = vld [vmem:[%s267 + $0x128] sm:$0xff]
      %v294 = vld [vmem:[%s267 + $0x138] sm:$0xff]
      %v295 = vld [vmem:[%s267 + $0x140] sm:$0xff]
      %v296 = vld [vmem:[%s267 + $0x150] sm:$0xff]
      %v297 = vld [vmem:[%s267 + $0x158] sm:$0xff]
      %v298 = vld [vmem:[%s267 + $0x168] sm:$0xff]
      %v299 = vld [vmem:[%s267 + $0x170] sm:$0xff]
      %v300 = vld [vmem:[%s267 + $0x1] sm:$0xff]
      %v301 = vld [vmem:[%s267 + $0x9] sm:$0xff]
      %v302 = vld [vmem:[%s267 + $0x19] sm:$0xff]
      %v303 = vld [vmem:[%s267 + $0x21] sm:$0xff]
      %v304 = vld [vmem:[%s267 + $0x31] sm:$0xff]
      %v305 = vld [vmem:[%s267 + $0x39] sm:$0xff]
      %v306 = vld [vmem:[%s267 + $0x49] sm:$0xff]
      %v307 = vld [vmem:[%s267 + $0x51] sm:$0xff]
      %v308 = vld [vmem:[%s267 + $0x61] sm:$0xff]
      %v309 = vld [vmem:[%s267 + $0x69] sm:$0xff]
      %v310 = vld [vmem:[%s267 + $0x79] sm:$0xff]
      %v311 = vld [vmem:[%s267 + $0x81] sm:$0xff]
      %v312 = vld [vmem:[%s267 + $0x91] sm:$0xff]
      %v313 = vld [vmem:[%s267 + $0x99] sm:$0xff]
      %v314 = vld [vmem:[%s267 + $0xa9] sm:$0xff]
      %v315 = vld [vmem:[%s267 + $0xb1] sm:$0xff]
      %v316 = vld [vmem:[%s267 + $0xc1] sm:$0xff]
      %v317 = vld [vmem:[%s267 + $0xc9] sm:$0xff]
      %v318 = vld [vmem:[%s267 + $0xd9] sm:$0xff]
      %v319 = vld [vmem:[%s267 + $0xe1] sm:$0xff]
      %v320 = vld [vmem:[%s267 + $0xf1] sm:$0xff]
      %v321 = vld [vmem:[%s267 + $0xf9] sm:$0xff]
      %v322 = vld [vmem:[%s267 + $0x109] sm:$0xff]
      %v323 = vld [vmem:[%s267 + $0x111] sm:$0xff]
      %v324 = vld [vmem:[%s267 + $0x121] sm:$0xff]
      %v325 = vld [vmem:[%s267 + $0x129] sm:$0xff]
      %v326 = vld [vmem:[%s267 + $0x139] sm:$0xff]
      %v327 = vld [vmem:[%s267 + $0x141] sm:$0xff]
      %v328 = vld [vmem:[%s267 + $0x151] sm:$0xff]
      %v329 = vld [vmem:[%s267 + $0x159] sm:$0xff]
      %v330 = vld [vmem:[%s267 + $0x169] sm:$0xff]
      %v331 = vld [vmem:[%s267 + $0x171] sm:$0xff]
      %v332 = vld [vmem:[%s267 + $0x2] sm:$0xff]
      %v333 = vld [vmem:[%s267 + $0xa] sm:$0xff]
      %v334 = vld [vmem:[%s267 + $0x1a] sm:$0xff]
      %v335 = vld [vmem:[%s267 + $0x22] sm:$0xff]
      %v336 = vld [vmem:[%s267 + $0x32] sm:$0xff]
      %v337 = vld [vmem:[%s267 + $0x3a] sm:$0xff]
      %v338 = vld [vmem:[%s267 + $0x4a] sm:$0xff]
      %v339 = vld [vmem:[%s267 + $0x52] sm:$0xff]
      %v340 = vld [vmem:[%s267 + $0x62] sm:$0xff]
      %v341 = vld [vmem:[%s267 + $0x6a] sm:$0xff]
      %v342 = vld [vmem:[%s267 + $0x7a] sm:$0xff]
      %v343 = vld [vmem:[%s267 + $0x82] sm:$0xff]
      %v344 = vld [vmem:[%s267 + $0x92] sm:$0xff]
      %v345 = vld [vmem:[%s267 + $0x9a] sm:$0xff]
      %v346 = vld [vmem:[%s267 + $0xaa] sm:$0xff]
      %v347 = vld [vmem:[%s267 + $0xb2] sm:$0xff]
      %v348 = vld [vmem:[%s267 + $0xc2] sm:$0xff]
      %v349 = vld [vmem:[%s267 + $0xca] sm:$0xff]
      %v350 = vld [vmem:[%s267 + $0xda] sm:$0xff]
      %v351 = vld [vmem:[%s267 + $0xe2] sm:$0xff]
      %v352 = vld [vmem:[%s267 + $0xf2] sm:$0xff]
      %v353 = vld [vmem:[%s267 + $0xfa] sm:$0xff]
      %v354 = vld [vmem:[%s267 + $0x10a] sm:$0xff]
      %v355 = vld [vmem:[%s267 + $0x112] sm:$0xff]
      %v356 = vld [vmem:[%s267 + $0x122] sm:$0xff]
      %v357 = vld [vmem:[%s267 + $0x12a] sm:$0xff]
      %v358 = vld [vmem:[%s267 + $0x13a] sm:$0xff]
      %v359 = vld [vmem:[%s267 + $0x142] sm:$0xff]
      %v360 = vld [vmem:[%s267 + $0x152] sm:$0xff]
      %v361 = vld [vmem:[%s267 + $0x15a] sm:$0xff]
      %v362 = vld [vmem:[%s267 + $0x16a] sm:$0xff]
      %v363 = vld [vmem:[%s267 + $0x172] sm:$0xff]
      %s364 = scalar_lea.vmem %s165, 48
      %v365 = vld [vmem:[%s364] sm:$0xff]
      %v366 = vld [vmem:[%s364 + $0x8] sm:$0xff]
      %v367 = vld [vmem:[%s364 + $0x18] sm:$0xff]
      %v368 = vld [vmem:[%s364 + $0x20] sm:$0xff]
      %v369 = vld [vmem:[%s364 + $0x30] sm:$0xff]
      %v370 = vld [vmem:[%s364 + $0x38] sm:$0xff]
      %v371 = vld [vmem:[%s364 + $0x48] sm:$0xff]
      %v372 = vld [vmem:[%s364 + $0x50] sm:$0xff]
      %v373 = vld [vmem:[%s364 + $0x60] sm:$0xff]
      %v374 = vld [vmem:[%s364 + $0x68] sm:$0xff]
      %v375 = vld [vmem:[%s364 + $0x78] sm:$0xff]
      %v376 = vld [vmem:[%s364 + $0x80] sm:$0xff]
      %v377 = vld [vmem:[%s364 + $0x90] sm:$0xff]
      %v378 = vld [vmem:[%s364 + $0x98] sm:$0xff]
      %v379 = vld [vmem:[%s364 + $0xa8] sm:$0xff]
      %v380 = vld [vmem:[%s364 + $0xb0] sm:$0xff]
      %v381 = vld [vmem:[%s364 + $0xc0] sm:$0xff]
      %v382 = vld [vmem:[%s364 + $0xc8] sm:$0xff]
      %v383 = vld [vmem:[%s364 + $0xd8] sm:$0xff]
      %v384 = vld [vmem:[%s364 + $0xe0] sm:$0xff]
      %v385 = vld [vmem:[%s364 + $0xf0] sm:$0xff]
      %v386 = vld [vmem:[%s364 + $0xf8] sm:$0xff]
      %v387 = vld [vmem:[%s364 + $0x108] sm:$0xff]
      %v388 = vld [vmem:[%s364 + $0x110] sm:$0xff]
      %v389 = vld [vmem:[%s364 + $0x120] sm:$0xff]
      %v390 = vld [vmem:[%s364 + $0x128] sm:$0xff]
      %v391 = vld [vmem:[%s364 + $0x138] sm:$0xff]
      %v392 = vld [vmem:[%s364 + $0x140] sm:$0xff]
      %v393 = vld [vmem:[%s364 + $0x150] sm:$0xff]
      %v394 = vld [vmem:[%s364 + $0x158] sm:$0xff]
      %v395 = vld [vmem:[%s364 + $0x168] sm:$0xff]
      %v396 = vld [vmem:[%s364 + $0x170] sm:$0xff]
      %v397 = vld [vmem:[%s364 + $0x1] sm:$0xff]
      %v398 = vld [vmem:[%s364 + $0x9] sm:$0xff]
      %v399 = vld [vmem:[%s364 + $0x19] sm:$0xff]
      %v400 = vld [vmem:[%s364 + $0x21] sm:$0xff]
      %v401 = vld [vmem:[%s364 + $0x31] sm:$0xff]
      %v402 = vld [vmem:[%s364 + $0x39] sm:$0xff]
      %v403 = vld [vmem:[%s364 + $0x49] sm:$0xff]
      %v404 = vld [vmem:[%s364 + $0x51] sm:$0xff]
      %v405 = vld [vmem:[%s364 + $0x61] sm:$0xff]
      %v406 = vld [vmem:[%s364 + $0x69] sm:$0xff]
      %v407 = vld [vmem:[%s364 + $0x79] sm:$0xff]
      %v408 = vld [vmem:[%s364 + $0x81] sm:$0xff]
      %v409 = vld [vmem:[%s364 + $0x91] sm:$0xff]
      %v410 = vld [vmem:[%s364 + $0x99] sm:$0xff]
      %v411 = vld [vmem:[%s364 + $0xa9] sm:$0xff]
      %v412 = vld [vmem:[%s364 + $0xb1] sm:$0xff]
      %v413 = vld [vmem:[%s364 + $0xc1] sm:$0xff]
      %v414 = vld [vmem:[%s364 + $0xc9] sm:$0xff]
      %v415 = vld [vmem:[%s364 + $0xd9] sm:$0xff]
      %v416 = vld [vmem:[%s364 + $0xe1] sm:$0xff]
      %v417 = vld [vmem:[%s364 + $0xf1] sm:$0xff]
      %v418 = vld [vmem:[%s364 + $0xf9] sm:$0xff]
      %v419 = vld [vmem:[%s364 + $0x109] sm:$0xff]
      %v420 = vld [vmem:[%s364 + $0x111] sm:$0xff]
      %v421 = vld [vmem:[%s364 + $0x121] sm:$0xff]
      %v422 = vld [vmem:[%s364 + $0x129] sm:$0xff]
      %v423 = vld [vmem:[%s364 + $0x139] sm:$0xff]
      %v424 = vld [vmem:[%s364 + $0x141] sm:$0xff]
      %v425 = vld [vmem:[%s364 + $0x151] sm:$0xff]
      %v426 = vld [vmem:[%s364 + $0x159] sm:$0xff]
      %v427 = vld [vmem:[%s364 + $0x169] sm:$0xff]
      %v428 = vld [vmem:[%s364 + $0x171] sm:$0xff]
      %v429 = vld [vmem:[%s364 + $0x2] sm:$0xff]
      %v430 = vld [vmem:[%s364 + $0xa] sm:$0xff]
      %v431 = vld [vmem:[%s364 + $0x1a] sm:$0xff]
      %v432 = vld [vmem:[%s364 + $0x22] sm:$0xff]
      %v433 = vld [vmem:[%s364 + $0x32] sm:$0xff]
      %v434 = vld [vmem:[%s364 + $0x3a] sm:$0xff]
      %v435 = vld [vmem:[%s364 + $0x4a] sm:$0xff]
      %v436 = vld [vmem:[%s364 + $0x52] sm:$0xff]
      %v437 = vld [vmem:[%s364 + $0x62] sm:$0xff]
      %v438 = vld [vmem:[%s364 + $0x6a] sm:$0xff]
      %v439 = vld [vmem:[%s364 + $0x7a] sm:$0xff]
      %v440 = vld [vmem:[%s364 + $0x82] sm:$0xff]
      %v441 = vld [vmem:[%s364 + $0x92] sm:$0xff]
      %v442 = vld [vmem:[%s364 + $0x9a] sm:$0xff]
      %v443 = vld [vmem:[%s364 + $0xaa] sm:$0xff]
      %v444 = vld [vmem:[%s364 + $0xb2] sm:$0xff]
      %v445 = vld [vmem:[%s364 + $0xc2] sm:$0xff]
      %v446 = vld [vmem:[%s364 + $0xca] sm:$0xff]
      %v447 = vld [vmem:[%s364 + $0xda] sm:$0xff]
      %v448 = vld [vmem:[%s364 + $0xe2] sm:$0xff]
      %v449 = vld [vmem:[%s364 + $0xf2] sm:$0xff]
      %v450 = vld [vmem:[%s364 + $0xfa] sm:$0xff]
      %v451 = vld [vmem:[%s364 + $0x10a] sm:$0xff]
      %v452 = vld [vmem:[%s364 + $0x112] sm:$0xff]
      %v453 = vld [vmem:[%s364 + $0x122] sm:$0xff]
      %v454 = vld [vmem:[%s364 + $0x12a] sm:$0xff]
      %v455 = vld [vmem:[%s364 + $0x13a] sm:$0xff]
      %v456 = vld [vmem:[%s364 + $0x142] sm:$0xff]
      %v457 = vld [vmem:[%s364 + $0x152] sm:$0xff]
      %v458 = vld [vmem:[%s364 + $0x15a] sm:$0xff]
      %v459 = vld [vmem:[%s364 + $0x16a] sm:$0xff]
      %v460 = vld [vmem:[%s364 + $0x172] sm:$0xff]
      %493 = vrot.lane.b32.xlu0 %v203, 4
      %v494 = vpop.permute.xlu0 %493
      %495 = vrot.lane.b32.xlu0 %v204, 4
      %v496 = vpop.permute.xlu0 %495
      %497 = vrot.lane.b32.xlu0 %v205, 4
      %v498 = vpop.permute.xlu0 %497
      %499 = vrot.lane.b32.xlu0 %v206, 4
      %v500 = vpop.permute.xlu0 %499
      %501 = vrot.lane.b32.xlu0 %v207, 4
      %v502 = vpop.permute.xlu0 %501
      %503 = vrot.lane.b32.xlu0 %v208, 4
      %v504 = vpop.permute.xlu0 %503
      %505 = vrot.lane.b32.xlu0 %v209, 4
      %v506 = vpop.permute.xlu0 %505
      %507 = vrot.lane.b32.xlu0 %v210, 4
      %v508 = vpop.permute.xlu0 %507
      %509 = vrot.lane.b32.xlu0 %v211, 4
      %v510 = vpop.permute.xlu0 %509
      %511 = vrot.lane.b32.xlu0 %v212, 4
      %v512 = vpop.permute.xlu0 %511
      %513 = vrot.lane.b32.xlu0 %v213, 4
      %v514 = vpop.permute.xlu0 %513
      %515 = vrot.lane.b32.xlu0 %v214, 4
      %v516 = vpop.permute.xlu0 %515
      %517 = vrot.lane.b32.xlu0 %v215, 4
      %v518 = vpop.permute.xlu0 %517
      %519 = vrot.lane.b32.xlu0 %v216, 4
      %v520 = vpop.permute.xlu0 %519
      %521 = vrot.lane.b32.xlu0 %v217, 4
      %v522 = vpop.permute.xlu0 %521
      %523 = vrot.lane.b32.xlu0 %v218, 4
      %v524 = vpop.permute.xlu0 %523
      %525 = vrot.lane.b32.xlu0 %v219, 4
      %v526 = vpop.permute.xlu0 %525
      %527 = vrot.lane.b32.xlu0 %v220, 4
      %v528 = vpop.permute.xlu0 %527
      %529 = vrot.lane.b32.xlu0 %v221, 4
      %v530 = vpop.permute.xlu0 %529
      %531 = vrot.lane.b32.xlu0 %v222, 4
      %v532 = vpop.permute.xlu0 %531
      %533 = vrot.lane.b32.xlu0 %v223, 4
      %v534 = vpop.permute.xlu0 %533
      %535 = vrot.lane.b32.xlu0 %v224, 4
      %v536 = vpop.permute.xlu0 %535
      %537 = vrot.lane.b32.xlu0 %v225, 4
      %v538 = vpop.permute.xlu0 %537
      %539 = vrot.lane.b32.xlu0 %v226, 4
      %v540 = vpop.permute.xlu0 %539
      %541 = vrot.lane.b32.xlu0 %v227, 4
      %v542 = vpop.permute.xlu0 %541
      %543 = vrot.lane.b32.xlu0 %v228, 4
      %v544 = vpop.permute.xlu0 %543
      %545 = vrot.lane.b32.xlu0 %v229, 4
      %v546 = vpop.permute.xlu0 %545
      %547 = vrot.lane.b32.xlu0 %v230, 4
      %v548 = vpop.permute.xlu0 %547
      %549 = vrot.lane.b32.xlu0 %v231, 4
      %v550 = vpop.permute.xlu0 %549
      %551 = vrot.lane.b32.xlu0 %v232, 4
      %v552 = vpop.permute.xlu0 %551
      %553 = vrot.lane.b32.xlu0 %v233, 4
      %v554 = vpop.permute.xlu0 %553
      %555 = vrot.lane.b32.xlu0 %v234, 4
      %v556 = vpop.permute.xlu0 %555
      %621 = vrot.lane.b32.xlu0 %v235, 8
      %v622 = vpop.permute.xlu0 %621
      %623 = vrot.lane.b32.xlu0 %v236, 8
      %v624 = vpop.permute.xlu0 %623
      %625 = vrot.lane.b32.xlu0 %v237, 8
      %v626 = vpop.permute.xlu0 %625
      %627 = vrot.lane.b32.xlu0 %v238, 8
      %v628 = vpop.permute.xlu0 %627
      %629 = vrot.lane.b32.xlu0 %v239, 8
      %v630 = vpop.permute.xlu0 %629
      %631 = vrot.lane.b32.xlu0 %v240, 8
      %v632 = vpop.permute.xlu0 %631
      %633 = vrot.lane.b32.xlu0 %v241, 8
      %v634 = vpop.permute.xlu0 %633
      %635 = vrot.lane.b32.xlu0 %v242, 8
      %v636 = vpop.permute.xlu0 %635
      %637 = vrot.lane.b32.xlu0 %v243, 8
      %v638 = vpop.permute.xlu0 %637
      %639 = vrot.lane.b32.xlu0 %v244, 8
      %v640 = vpop.permute.xlu0 %639
      %641 = vrot.lane.b32.xlu0 %v245, 8
      %v642 = vpop.permute.xlu0 %641
      %643 = vrot.lane.b32.xlu0 %v246, 8
      %v644 = vpop.permute.xlu0 %643
      %645 = vrot.lane.b32.xlu0 %v247, 8
      %v646 = vpop.permute.xlu0 %645
      %647 = vrot.lane.b32.xlu0 %v248, 8
      %v648 = vpop.permute.xlu0 %647
      %649 = vrot.lane.b32.xlu0 %v249, 8
      %v650 = vpop.permute.xlu0 %649
      %651 = vrot.lane.b32.xlu0 %v250, 8
      %v652 = vpop.permute.xlu0 %651
      %653 = vrot.lane.b32.xlu0 %v251, 8
      %v654 = vpop.permute.xlu0 %653
      %655 = vrot.lane.b32.xlu0 %v252, 8
      %v656 = vpop.permute.xlu0 %655
      %657 = vrot.lane.b32.xlu0 %v253, 8
      %v658 = vpop.permute.xlu0 %657
      %659 = vrot.lane.b32.xlu0 %v254, 8
      %v660 = vpop.permute.xlu0 %659
      %661 = vrot.lane.b32.xlu0 %v255, 8
      %v662 = vpop.permute.xlu0 %661
      %663 = vrot.lane.b32.xlu0 %v256, 8
      %v664 = vpop.permute.xlu0 %663
      %665 = vrot.lane.b32.xlu0 %v257, 8
      %v666 = vpop.permute.xlu0 %665
      %667 = vrot.lane.b32.xlu0 %v258, 8
      %v668 = vpop.permute.xlu0 %667
      %669 = vrot.lane.b32.xlu0 %v259, 8
      %v670 = vpop.permute.xlu0 %669
      %671 = vrot.lane.b32.xlu0 %v260, 8
      %v672 = vpop.permute.xlu0 %671
      %673 = vrot.lane.b32.xlu0 %v261, 8
      %v674 = vpop.permute.xlu0 %673
      %675 = vrot.lane.b32.xlu0 %v262, 8
      %v676 = vpop.permute.xlu0 %675
      %677 = vrot.lane.b32.xlu0 %v263, 8
      %v678 = vpop.permute.xlu0 %677
      %679 = vrot.lane.b32.xlu0 %v264, 8
      %v680 = vpop.permute.xlu0 %679
      %681 = vrot.lane.b32.xlu0 %v265, 8
      %v682 = vpop.permute.xlu0 %681
      %683 = vrot.lane.b32.xlu0 %v266, 8
      %v684 = vpop.permute.xlu0 %683
      %749 = vrot.lane.b32.xlu0 %v268, 12
      %v750 = vpop.permute.xlu0 %749
      %751 = vrot.lane.b32.xlu0 %v269, 12
      %v752 = vpop.permute.xlu0 %751
      %753 = vrot.lane.b32.xlu0 %v270, 12
      %v754 = vpop.permute.xlu0 %753
      %755 = vrot.lane.b32.xlu0 %v271, 12
      %v756 = vpop.permute.xlu0 %755
      %757 = vrot.lane.b32.xlu0 %v272, 12
      %v758 = vpop.permute.xlu0 %757
      %759 = vrot.lane.b32.xlu0 %v273, 12
      %v760 = vpop.permute.xlu0 %759
      %761 = vrot.lane.b32.xlu0 %v274, 12
      %v762 = vpop.permute.xlu0 %761
      %763 = vrot.lane.b32.xlu0 %v275, 12
      %v764 = vpop.permute.xlu0 %763
      %765 = vrot.lane.b32.xlu0 %v276, 12
      %v766 = vpop.permute.xlu0 %765
      %767 = vrot.lane.b32.xlu0 %v277, 12
      %v768 = vpop.permute.xlu0 %767
      %769 = vrot.lane.b32.xlu0 %v278, 12
      %v770 = vpop.permute.xlu0 %769
      %771 = vrot.lane.b32.xlu0 %v279, 12
      %v772 = vpop.permute.xlu0 %771
      %773 = vrot.lane.b32.xlu0 %v280, 12
      %v774 = vpop.permute.xlu0 %773
      %775 = vrot.lane.b32.xlu0 %v281, 12
      %v776 = vpop.permute.xlu0 %775
      %777 = vrot.lane.b32.xlu0 %v282, 12
      %v778 = vpop.permute.xlu0 %777
      %779 = vrot.lane.b32.xlu0 %v283, 12
      %v780 = vpop.permute.xlu0 %779
      %781 = vrot.lane.b32.xlu0 %v284, 12
      %v782 = vpop.permute.xlu0 %781
      %783 = vrot.lane.b32.xlu0 %v285, 12
      %v784 = vpop.permute.xlu0 %783
      %785 = vrot.lane.b32.xlu0 %v286, 12
      %v786 = vpop.permute.xlu0 %785
      %787 = vrot.lane.b32.xlu0 %v287, 12
      %v788 = vpop.permute.xlu0 %787
      %789 = vrot.lane.b32.xlu0 %v288, 12
      %v790 = vpop.permute.xlu0 %789
      %791 = vrot.lane.b32.xlu0 %v289, 12
      %v792 = vpop.permute.xlu0 %791
      %793 = vrot.lane.b32.xlu0 %v290, 12
      %v794 = vpop.permute.xlu0 %793
      %795 = vrot.lane.b32.xlu0 %v291, 12
      %v796 = vpop.permute.xlu0 %795
      %797 = vrot.lane.b32.xlu0 %v292, 12
      %v798 = vpop.permute.xlu0 %797
      %799 = vrot.lane.b32.xlu0 %v293, 12
      %v800 = vpop.permute.xlu0 %799
      %801 = vrot.lane.b32.xlu0 %v294, 12
      %v802 = vpop.permute.xlu0 %801
      %803 = vrot.lane.b32.xlu0 %v295, 12
      %v804 = vpop.permute.xlu0 %803
      %805 = vrot.lane.b32.xlu0 %v296, 12
      %v806 = vpop.permute.xlu0 %805
      %807 = vrot.lane.b32.xlu0 %v297, 12
      %v808 = vpop.permute.xlu0 %807
      %809 = vrot.lane.b32.xlu0 %v298, 12
      %v810 = vpop.permute.xlu0 %809
      %811 = vrot.lane.b32.xlu0 %v299, 12
      %v812 = vpop.permute.xlu0 %811
      %877 = vrot.lane.b32.xlu0 %v300, 16
      %v878 = vpop.permute.xlu0 %877
      %879 = vrot.lane.b32.xlu0 %v301, 16
      %v880 = vpop.permute.xlu0 %879
      %881 = vrot.lane.b32.xlu0 %v302, 16
      %v882 = vpop.permute.xlu0 %881
      %883 = vrot.lane.b32.xlu0 %v303, 16
      %v884 = vpop.permute.xlu0 %883
      %885 = vrot.lane.b32.xlu0 %v304, 16
      %v886 = vpop.permute.xlu0 %885
      %887 = vrot.lane.b32.xlu0 %v305, 16
      %v888 = vpop.permute.xlu0 %887
      %889 = vrot.lane.b32.xlu0 %v306, 16
      %v890 = vpop.permute.xlu0 %889
      %891 = vrot.lane.b32.xlu0 %v307, 16
      %v892 = vpop.permute.xlu0 %891
      %893 = vrot.lane.b32.xlu0 %v308, 16
      %v894 = vpop.permute.xlu0 %893
      %895 = vrot.lane.b32.xlu0 %v309, 16
      %v896 = vpop.permute.xlu0 %895
      %897 = vrot.lane.b32.xlu0 %v310, 16
      %v898 = vpop.permute.xlu0 %897
      %899 = vrot.lane.b32.xlu0 %v311, 16
      %v900 = vpop.permute.xlu0 %899
      %901 = vrot.lane.b32.xlu0 %v312, 16
      %v902 = vpop.permute.xlu0 %901
      %903 = vrot.lane.b32.xlu0 %v313, 16
      %v904 = vpop.permute.xlu0 %903
      %905 = vrot.lane.b32.xlu0 %v314, 16
      %v906 = vpop.permute.xlu0 %905
      %907 = vrot.lane.b32.xlu0 %v315, 16
      %v908 = vpop.permute.xlu0 %907
      %909 = vrot.lane.b32.xlu0 %v316, 16
      %v910 = vpop.permute.xlu0 %909
      %911 = vrot.lane.b32.xlu0 %v317, 16
      %v912 = vpop.permute.xlu0 %911
      %913 = vrot.lane.b32.xlu0 %v318, 16
      %v914 = vpop.permute.xlu0 %913
      %915 = vrot.lane.b32.xlu0 %v319, 16
      %v916 = vpop.permute.xlu0 %915
      %917 = vrot.lane.b32.xlu0 %v320, 16
      %v918 = vpop.permute.xlu0 %917
      %919 = vrot.lane.b32.xlu0 %v321, 16
      %v920 = vpop.permute.xlu0 %919
      %921 = vrot.lane.b32.xlu0 %v322, 16
      %v922 = vpop.permute.xlu0 %921
      %923 = vrot.lane.b32.xlu0 %v323, 16
      %v924 = vpop.permute.xlu0 %923
      %925 = vrot.lane.b32.xlu0 %v324, 16
      %v926 = vpop.permute.xlu0 %925
      %927 = vrot.lane.b32.xlu0 %v325, 16
      %v928 = vpop.permute.xlu0 %927
      %929 = vrot.lane.b32.xlu0 %v326, 16
      %v930 = vpop.permute.xlu0 %929
      %931 = vrot.lane.b32.xlu0 %v327, 16
      %v932 = vpop.permute.xlu0 %931
      %933 = vrot.lane.b32.xlu0 %v328, 16
      %v934 = vpop.permute.xlu0 %933
      %935 = vrot.lane.b32.xlu0 %v329, 16
      %v936 = vpop.permute.xlu0 %935
      %937 = vrot.lane.b32.xlu0 %v330, 16
      %v938 = vpop.permute.xlu0 %937
      %939 = vrot.lane.b32.xlu0 %v331, 16
      %v940 = vpop.permute.xlu0 %939
      %1005 = vrot.lane.b32.xlu0 %v332, 20
      %v1006 = vpop.permute.xlu0 %1005
      %1007 = vrot.lane.b32.xlu0 %v333, 20
      %v1008 = vpop.permute.xlu0 %1007
      %1009 = vrot.lane.b32.xlu0 %v334, 20
      %v1010 = vpop.permute.xlu0 %1009
      %1011 = vrot.lane.b32.xlu0 %v335, 20
      %v1012 = vpop.permute.xlu0 %1011
      %1013 = vrot.lane.b32.xlu0 %v336, 20
      %v1014 = vpop.permute.xlu0 %1013
      %1015 = vrot.lane.b32.xlu0 %v337, 20
      %v1016 = vpop.permute.xlu0 %1015
      %1017 = vrot.lane.b32.xlu0 %v338, 20
      %v1018 = vpop.permute.xlu0 %1017
      %1019 = vrot.lane.b32.xlu0 %v339, 20
      %v1020 = vpop.permute.xlu0 %1019
      %1021 = vrot.lane.b32.xlu0 %v340, 20
      %v1022 = vpop.permute.xlu0 %1021
      %1023 = vrot.lane.b32.xlu0 %v341, 20
      %v1024 = vpop.permute.xlu0 %1023
      %1025 = vrot.lane.b32.xlu0 %v342, 20
      %v1026 = vpop.permute.xlu0 %1025
      %1027 = vrot.lane.b32.xlu0 %v343, 20
      %v1028 = vpop.permute.xlu0 %1027
      %1029 = vrot.lane.b32.xlu0 %v344, 20
      %v1030 = vpop.permute.xlu0 %1029
      %1031 = vrot.lane.b32.xlu0 %v345, 20
      %v1032 = vpop.permute.xlu0 %1031
      %1033 = vrot.lane.b32.xlu0 %v346, 20
      %v1034 = vpop.permute.xlu0 %1033
      %1035 = vrot.lane.b32.xlu0 %v347, 20
      %v1036 = vpop.permute.xlu0 %1035
      %1037 = vrot.lane.b32.xlu0 %v348, 20
      %v1038 = vpop.permute.xlu0 %1037
      %1039 = vrot.lane.b32.xlu0 %v349, 20
      %v1040 = vpop.permute.xlu0 %1039
      %1041 = vrot.lane.b32.xlu0 %v350, 20
      %v1042 = vpop.permute.xlu0 %1041
      %1043 = vrot.lane.b32.xlu0 %v351, 20
      %v1044 = vpop.permute.xlu0 %1043
      %1045 = vrot.lane.b32.xlu0 %v352, 20
      %v1046 = vpop.permute.xlu0 %1045
      %1047 = vrot.lane.b32.xlu0 %v353, 20
      %v1048 = vpop.permute.xlu0 %1047
      %1049 = vrot.lane.b32.xlu0 %v354, 20
      %v1050 = vpop.permute.xlu0 %1049
      %1051 = vrot.lane.b32.xlu0 %v355, 20
      %v1052 = vpop.permute.xlu0 %1051
      %1053 = vrot.lane.b32.xlu0 %v356, 20
      %v1054 = vpop.permute.xlu0 %1053
      %1055 = vrot.lane.b32.xlu0 %v357, 20
      %v1056 = vpop.permute.xlu0 %1055
      %1057 = vrot.lane.b32.xlu0 %v358, 20
      %v1058 = vpop.permute.xlu0 %1057
      %1059 = vrot.lane.b32.xlu0 %v359, 20
      %v1060 = vpop.permute.xlu0 %1059
      %1061 = vrot.lane.b32.xlu0 %v360, 20
      %v1062 = vpop.permute.xlu0 %1061
      %1063 = vrot.lane.b32.xlu0 %v361, 20
      %v1064 = vpop.permute.xlu0 %1063
      %1065 = vrot.lane.b32.xlu0 %v362, 20
      %v1066 = vpop.permute.xlu0 %1065
      %1067 = vrot.lane.b32.xlu0 %v363, 20
      %v1068 = vpop.permute.xlu0 %1067
      %1133 = vrot.lane.b32.xlu0 %v365, 24
      %v1134 = vpop.permute.xlu0 %1133
      %1135 = vrot.lane.b32.xlu0 %v366, 24
      %v1136 = vpop.permute.xlu0 %1135
      %1137 = vrot.lane.b32.xlu0 %v367, 24
      %v1138 = vpop.permute.xlu0 %1137
      %1139 = vrot.lane.b32.xlu0 %v368, 24
      %v1140 = vpop.permute.xlu0 %1139
      %1141 = vrot.lane.b32.xlu0 %v369, 24
      %v1142 = vpop.permute.xlu0 %1141
      %1143 = vrot.lane.b32.xlu0 %v370, 24
      %v1144 = vpop.permute.xlu0 %1143
      %1145 = vrot.lane.b32.xlu0 %v371, 24
      %v1146 = vpop.permute.xlu0 %1145
      %1147 = vrot.lane.b32.xlu0 %v372, 24
      %v1148 = vpop.permute.xlu0 %1147
      %1149 = vrot.lane.b32.xlu0 %v373, 24
      %v1150 = vpop.permute.xlu0 %1149
      %1151 = vrot.lane.b32.xlu0 %v374, 24
      %v1152 = vpop.permute.xlu0 %1151
      %1153 = vrot.lane.b32.xlu0 %v375, 24
      %v1154 = vpop.permute.xlu0 %1153
      %1155 = vrot.lane.b32.xlu0 %v376, 24
      %v1156 = vpop.permute.xlu0 %1155
      %1157 = vrot.lane.b32.xlu0 %v377, 24
      %v1158 = vpop.permute.xlu0 %1157
      %1159 = vrot.lane.b32.xlu0 %v378, 24
      %v1160 = vpop.permute.xlu0 %1159
      %1161 = vrot.lane.b32.xlu0 %v379, 24
      %v1162 = vpop.permute.xlu0 %1161
      %1163 = vrot.lane.b32.xlu0 %v380, 24
      %v1164 = vpop.permute.xlu0 %1163
      %1165 = vrot.lane.b32.xlu0 %v381, 24
      %v1166 = vpop.permute.xlu0 %1165
      %1167 = vrot.lane.b32.xlu0 %v382, 24
      %v1168 = vpop.permute.xlu0 %1167
      %1169 = vrot.lane.b32.xlu0 %v383, 24
      %v1170 = vpop.permute.xlu0 %1169
      %1171 = vrot.lane.b32.xlu0 %v384, 24
      %v1172 = vpop.permute.xlu0 %1171
      %1173 = vrot.lane.b32.xlu0 %v385, 24
      %v1174 = vpop.permute.xlu0 %1173
      %1175 = vrot.lane.b32.xlu0 %v386, 24
      %v1176 = vpop.permute.xlu0 %1175
      %1177 = vrot.lane.b32.xlu0 %v387, 24
      %v1178 = vpop.permute.xlu0 %1177
      %1179 = vrot.lane.b32.xlu0 %v388, 24
      %v1180 = vpop.permute.xlu0 %1179
      %1181 = vrot.lane.b32.xlu0 %v389, 24
      %v1182 = vpop.permute.xlu0 %1181
      %1183 = vrot.lane.b32.xlu0 %v390, 24
      %v1184 = vpop.permute.xlu0 %1183
      %1185 = vrot.lane.b32.xlu0 %v391, 24
      %v1186 = vpop.permute.xlu0 %1185
      %1187 = vrot.lane.b32.xlu0 %v392, 24
      %v1188 = vpop.permute.xlu0 %1187
      %1189 = vrot.lane.b32.xlu0 %v393, 24
      %v1190 = vpop.permute.xlu0 %1189
      %1191 = vrot.lane.b32.xlu0 %v394, 24
      %v1192 = vpop.permute.xlu0 %1191
      %1193 = vrot.lane.b32.xlu0 %v395, 24
      %v1194 = vpop.permute.xlu0 %1193
      %1195 = vrot.lane.b32.xlu0 %v396, 24
      %v1196 = vpop.permute.xlu0 %1195
      %1261 = vrot.lane.b32.xlu0 %v397, 28
      %v1262 = vpop.permute.xlu0 %1261
      %1263 = vrot.lane.b32.xlu0 %v398, 28
      %v1264 = vpop.permute.xlu0 %1263
      %1265 = vrot.lane.b32.xlu0 %v399, 28
      %v1266 = vpop.permute.xlu0 %1265
      %1267 = vrot.lane.b32.xlu0 %v400, 28
      %v1268 = vpop.permute.xlu0 %1267
      %1269 = vrot.lane.b32.xlu0 %v401, 28
      %v1270 = vpop.permute.xlu0 %1269
      %1271 = vrot.lane.b32.xlu0 %v402, 28
      %v1272 = vpop.permute.xlu0 %1271
      %1273 = vrot.lane.b32.xlu0 %v403, 28
      %v1274 = vpop.permute.xlu0 %1273
      %1275 = vrot.lane.b32.xlu0 %v404, 28
      %v1276 = vpop.permute.xlu0 %1275
      %1277 = vrot.lane.b32.xlu0 %v405, 28
      %v1278 = vpop.permute.xlu0 %1277
      %1279 = vrot.lane.b32.xlu0 %v406, 28
      %v1280 = vpop.permute.xlu0 %1279
      %1281 = vrot.lane.b32.xlu0 %v407, 28
      %v1282 = vpop.permute.xlu0 %1281
      %1283 = vrot.lane.b32.xlu0 %v408, 28
      %v1284 = vpop.permute.xlu0 %1283
      %1285 = vrot.lane.b32.xlu0 %v409, 28
      %v1286 = vpop.permute.xlu0 %1285
      %1287 = vrot.lane.b32.xlu0 %v410, 28
      %v1288 = vpop.permute.xlu0 %1287
      %1289 = vrot.lane.b32.xlu0 %v411, 28
      %v1290 = vpop.permute.xlu0 %1289
      %1291 = vrot.lane.b32.xlu0 %v412, 28
      %v1292 = vpop.permute.xlu0 %1291
      %1293 = vrot.lane.b32.xlu0 %v413, 28
      %v1294 = vpop.permute.xlu0 %1293
      %1295 = vrot.lane.b32.xlu0 %v414, 28
      %v1296 = vpop.permute.xlu0 %1295
      %1297 = vrot.lane.b32.xlu0 %v415, 28
      %v1298 = vpop.permute.xlu0 %1297
      %1299 = vrot.lane.b32.xlu0 %v416, 28
      %v1300 = vpop.permute.xlu0 %1299
      %1301 = vrot.lane.b32.xlu0 %v417, 28
      %v1302 = vpop.permute.xlu0 %1301
      %1303 = vrot.lane.b32.xlu0 %v418, 28
      %v1304 = vpop.permute.xlu0 %1303
      %1305 = vrot.lane.b32.xlu0 %v419, 28
      %v1306 = vpop.permute.xlu0 %1305
      %1307 = vrot.lane.b32.xlu0 %v420, 28
      %v1308 = vpop.permute.xlu0 %1307
      %1309 = vrot.lane.b32.xlu0 %v421, 28
      %v1310 = vpop.permute.xlu0 %1309
      %1311 = vrot.lane.b32.xlu0 %v422, 28
      %v1312 = vpop.permute.xlu0 %1311
      %1313 = vrot.lane.b32.xlu0 %v423, 28
      %v1314 = vpop.permute.xlu0 %1313
      %1315 = vrot.lane.b32.xlu0 %v424, 28
      %v1316 = vpop.permute.xlu0 %1315
      %1317 = vrot.lane.b32.xlu0 %v425, 28
      %v1318 = vpop.permute.xlu0 %1317
      %1319 = vrot.lane.b32.xlu0 %v426, 28
      %v1320 = vpop.permute.xlu0 %1319
      %1321 = vrot.lane.b32.xlu0 %v427, 28
      %v1322 = vpop.permute.xlu0 %1321
      %1323 = vrot.lane.b32.xlu0 %v428, 28
      %v1324 = vpop.permute.xlu0 %1323
      %1389 = vrot.lane.b32.xlu0 %v429, 32
      %v1390 = vpop.permute.xlu0 %1389
      %1391 = vrot.lane.b32.xlu0 %v430, 32
      %v1392 = vpop.permute.xlu0 %1391
      %1393 = vrot.lane.b32.xlu0 %v431, 32
      %v1394 = vpop.permute.xlu0 %1393
      %1395 = vrot.lane.b32.xlu0 %v432, 32
      %v1396 = vpop.permute.xlu0 %1395
      %1397 = vrot.lane.b32.xlu0 %v433, 32
      %v1398 = vpop.permute.xlu0 %1397
      %1399 = vrot.lane.b32.xlu0 %v434, 32
      %v1400 = vpop.permute.xlu0 %1399
      %1401 = vrot.lane.b32.xlu0 %v435, 32
      %v1402 = vpop.permute.xlu0 %1401
      %1403 = vrot.lane.b32.xlu0 %v436, 32
      %v1404 = vpop.permute.xlu0 %1403
      %1405 = vrot.lane.b32.xlu0 %v437, 32
      %v1406 = vpop.permute.xlu0 %1405
      %1407 = vrot.lane.b32.xlu0 %v438, 32
      %v1408 = vpop.permute.xlu0 %1407
      %1409 = vrot.lane.b32.xlu0 %v439, 32
      %v1410 = vpop.permute.xlu0 %1409
      %1411 = vrot.lane.b32.xlu0 %v440, 32
      %v1412 = vpop.permute.xlu0 %1411
      %1413 = vrot.lane.b32.xlu0 %v441, 32
      %v1414 = vpop.permute.xlu0 %1413
      %1415 = vrot.lane.b32.xlu0 %v442, 32
      %v1416 = vpop.permute.xlu0 %1415
      %1417 = vrot.lane.b32.xlu0 %v443, 32
      %v1418 = vpop.permute.xlu0 %1417
      %1419 = vrot.lane.b32.xlu0 %v444, 32
      %v1420 = vpop.permute.xlu0 %1419
      %1421 = vrot.lane.b32.xlu0 %v445, 32
      %v1422 = vpop.permute.xlu0 %1421
      %1423 = vrot.lane.b32.xlu0 %v446, 32
      %v1424 = vpop.permute.xlu0 %1423
      %1425 = vrot.lane.b32.xlu0 %v447, 32
      %v1426 = vpop.permute.xlu0 %1425
      %1427 = vrot.lane.b32.xlu0 %v448, 32
      %v1428 = vpop.permute.xlu0 %1427
      %1429 = vrot.lane.b32.xlu0 %v449, 32
      %v1430 = vpop.permute.xlu0 %1429
      %1431 = vrot.lane.b32.xlu0 %v450, 32
      %v1432 = vpop.permute.xlu0 %1431
      %1433 = vrot.lane.b32.xlu0 %v451, 32
      %v1434 = vpop.permute.xlu0 %1433
      %1435 = vrot.lane.b32.xlu0 %v452, 32
      %v1436 = vpop.permute.xlu0 %1435
      %1437 = vrot.lane.b32.xlu0 %v453, 32
      %v1438 = vpop.permute.xlu0 %1437
      %1439 = vrot.lane.b32.xlu0 %v454, 32
      %v1440 = vpop.permute.xlu0 %1439
      %1441 = vrot.lane.b32.xlu0 %v455, 32
      %v1442 = vpop.permute.xlu0 %1441
      %1443 = vrot.lane.b32.xlu0 %v456, 32
      %v1444 = vpop.permute.xlu0 %1443
      %1445 = vrot.lane.b32.xlu0 %v457, 32
      %v1446 = vpop.permute.xlu0 %1445
      %1447 = vrot.lane.b32.xlu0 %v458, 32
      %v1448 = vpop.permute.xlu0 %1447
      %1449 = vrot.lane.b32.xlu0 %v459, 32
      %v1450 = vpop.permute.xlu0 %1449
      %1451 = vrot.lane.b32.xlu0 %v460, 32
      %v1452 = vpop.permute.xlu0 %1451
      %vm1485 = vcmask 31744
      %v1486 = vsel %vm1485, %v171, %v494
      %v1487 = vsel %vm1485, %v172, %v496
      %v1488 = vsel %vm1485, %v173, %v498
      %v1489 = vsel %vm1485, %v174, %v500
      %v1490 = vsel %vm1485, %v175, %v502
      %v1491 = vsel %vm1485, %v176, %v504
      %v1492 = vsel %vm1485, %v177, %v506
      %v1493 = vsel %vm1485, %v178, %v508
      %v1494 = vsel %vm1485, %v179, %v510
      %v1495 = vsel %vm1485, %v180, %v512
      %v1496 = vsel %vm1485, %v181, %v514
      %v1497 = vsel %vm1485, %v182, %v516
      %v1498 = vsel %vm1485, %v183, %v518
      %v1499 = vsel %vm1485, %v184, %v520
      %v1500 = vsel %vm1485, %v185, %v522
      %v1501 = vsel %vm1485, %v186, %v524
      %v1502 = vsel %vm1485, %v187, %v526
      %v1503 = vsel %vm1485, %v188, %v528
      %v1504 = vsel %vm1485, %v189, %v530
      %v1505 = vsel %vm1485, %v190, %v532
      %v1506 = vsel %vm1485, %v191, %v534
      %v1507 = vsel %vm1485, %v192, %v536
      %v1508 = vsel %vm1485, %v193, %v538
      %v1509 = vsel %vm1485, %v194, %v540
      %v1510 = vsel %vm1485, %v195, %v542
      %v1511 = vsel %vm1485, %v196, %v544
      %v1512 = vsel %vm1485, %v197, %v546
      %v1513 = vsel %vm1485, %v198, %v548
      %v1514 = vsel %vm1485, %v199, %v550
      %v1515 = vsel %vm1485, %v200, %v552
      %v1516 = vsel %vm1485, %v201, %v554
      %v1517 = vsel %vm1485, %v202, %v556
      %vm1518 = vcmask 64512
      %v1519 = vsel %vm1518, %v1486, %v622
      %v1520 = vsel %vm1518, %v1487, %v624
      %v1521 = vsel %vm1518, %v1488, %v626
      %v1522 = vsel %vm1518, %v1489, %v628
      %v1523 = vsel %vm1518, %v1490, %v630
      %v1524 = vsel %vm1518, %v1491, %v632
      %v1525 = vsel %vm1518, %v1492, %v634
      %v1526 = vsel %vm1518, %v1493, %v636
      %v1527 = vsel %vm1518, %v1494, %v638
      %v1528 = vsel %vm1518, %v1495, %v640
      %v1529 = vsel %vm1518, %v1496, %v642
      %v1530 = vsel %vm1518, %v1497, %v644
      %v1531 = vsel %vm1518, %v1498, %v646
      %v1532 = vsel %vm1518, %v1499, %v648
      %v1533 = vsel %vm1518, %v1500, %v650
      %v1534 = vsel %vm1518, %v1501, %v652
      %v1535 = vsel %vm1518, %v1502, %v654
      %v1536 = vsel %vm1518, %v1503, %v656
      %v1537 = vsel %vm1518, %v1504, %v658
      %v1538 = vsel %vm1518, %v1505, %v660
      %v1539 = vsel %vm1518, %v1506, %v662
      %v1540 = vsel %vm1518, %v1507, %v664
      %v1541 = vsel %vm1518, %v1508, %v666
      %v1542 = vsel %vm1518, %v1509, %v668
      %v1543 = vsel %vm1518, %v1510, %v670
      %v1544 = vsel %vm1518, %v1511, %v672
      %v1545 = vsel %vm1518, %v1512, %v674
      %v1546 = vsel %vm1518, %v1513, %v676
      %v1547 = vsel %vm1518, %v1514, %v678
      %v1548 = vsel %vm1518, %v1515, %v680
      %v1549 = vsel %vm1518, %v1516, %v682
      %v1550 = vsel %vm1518, %v1517, %v684
      %vm1551 = vcmask 97280
      %v1552 = vsel %vm1551, %v1519, %v750
      %v1553 = vsel %vm1551, %v1520, %v752
      %v1554 = vsel %vm1551, %v1521, %v754
      %v1555 = vsel %vm1551, %v1522, %v756
      %v1556 = vsel %vm1551, %v1523, %v758
      %v1557 = vsel %vm1551, %v1524, %v760
      %v1558 = vsel %vm1551, %v1525, %v762
      %v1559 = vsel %vm1551, %v1526, %v764
      %v1560 = vsel %vm1551, %v1527, %v766
      %v1561 = vsel %vm1551, %v1528, %v768
      %v1562 = vsel %vm1551, %v1529, %v770
      %v1563 = vsel %vm1551, %v1530, %v772
      %v1564 = vsel %vm1551, %v1531, %v774
      %v1565 = vsel %vm1551, %v1532, %v776
      %v1566 = vsel %vm1551, %v1533, %v778
      %v1567 = vsel %vm1551, %v1534, %v780
      %v1568 = vsel %vm1551, %v1535, %v782
      %v1569 = vsel %vm1551, %v1536, %v784
      %v1570 = vsel %vm1551, %v1537, %v786
      %v1571 = vsel %vm1551, %v1538, %v788
      %v1572 = vsel %vm1551, %v1539, %v790
      %v1573 = vsel %vm1551, %v1540, %v792
      %v1574 = vsel %vm1551, %v1541, %v794
      %v1575 = vsel %vm1551, %v1542, %v796
      %v1576 = vsel %vm1551, %v1543, %v798
      %v1577 = vsel %vm1551, %v1544, %v800
      %v1578 = vsel %vm1551, %v1545, %v802
      %v1579 = vsel %vm1551, %v1546, %v804
      %v1580 = vsel %vm1551, %v1547, %v806
      %v1581 = vsel %vm1551, %v1548, %v808
      %v1582 = vsel %vm1551, %v1549, %v810
      %v1583 = vsel %vm1551, %v1550, %v812
      %vm1584 = vcmask 130048
      %v1585 = vsel %vm1584, %v1552, %v878
      %v1586 = vsel %vm1584, %v1553, %v880
      %v1587 = vsel %vm1584, %v1554, %v882
      %v1588 = vsel %vm1584, %v1555, %v884
      %v1589 = vsel %vm1584, %v1556, %v886
      %v1590 = vsel %vm1584, %v1557, %v888
      %v1591 = vsel %vm1584, %v1558, %v890
      %v1592 = vsel %vm1584, %v1559, %v892
      %v1593 = vsel %vm1584, %v1560, %v894
      %v1594 = vsel %vm1584, %v1561, %v896
      %v1595 = vsel %vm1584, %v1562, %v898
      %v1596 = vsel %vm1584, %v1563, %v900
      %v1597 = vsel %vm1584, %v1564, %v902
      %v1598 = vsel %vm1584, %v1565, %v904
      %v1599 = vsel %vm1584, %v1566, %v906
      %v1600 = vsel %vm1584, %v1567, %v908
      %v1601 = vsel %vm1584, %v1568, %v910
      %v1602 = vsel %vm1584, %v1569, %v912
      %v1603 = vsel %vm1584, %v1570, %v914
      %v1604 = vsel %vm1584, %v1571, %v916
      %v1605 = vsel %vm1584, %v1572, %v918
      %v1606 = vsel %vm1584, %v1573, %v920
      %v1607 = vsel %vm1584, %v1574, %v922
      %v1608 = vsel %vm1584, %v1575, %v924
      %v1609 = vsel %vm1584, %v1576, %v926
      %v1610 = vsel %vm1584, %v1577, %v928
      %v1611 = vsel %vm1584, %v1578, %v930
      %v1612 = vsel %vm1584, %v1579, %v932
      %v1613 = vsel %vm1584, %v1580, %v934
      %v1614 = vsel %vm1584, %v1581, %v936
      %v1615 = vsel %vm1584, %v1582, %v938
      %v1616 = vsel %vm1584, %v1583, %v940
      %vm1617 = vcmask 162816
      %v1618 = vsel %vm1617, %v1585, %v1006
      %v1619 = vsel %vm1617, %v1586, %v1008
      %v1620 = vsel %vm1617, %v1587, %v1010
      %v1621 = vsel %vm1617, %v1588, %v1012
      %v1622 = vsel %vm1617, %v1589, %v1014
      %v1623 = vsel %vm1617, %v1590, %v1016
      %v1624 = vsel %vm1617, %v1591, %v1018
      %v1625 = vsel %vm1617, %v1592, %v1020
      %v1626 = vsel %vm1617, %v1593, %v1022
      %v1627 = vsel %vm1617, %v1594, %v1024
      %v1628 = vsel %vm1617, %v1595, %v1026
      %v1629 = vsel %vm1617, %v1596, %v1028
      %v1630 = vsel %vm1617, %v1597, %v1030
      %v1631 = vsel %vm1617, %v1598, %v1032
      %v1632 = vsel %vm1617, %v1599, %v1034
      %v1633 = vsel %vm1617, %v1600, %v1036
      %v1634 = vsel %vm1617, %v1601, %v1038
      %v1635 = vsel %vm1617, %v1602, %v1040
      %v1636 = vsel %vm1617, %v1603, %v1042
      %v1637 = vsel %vm1617, %v1604, %v1044
      %v1638 = vsel %vm1617, %v1605, %v1046
      %v1639 = vsel %vm1617, %v1606, %v1048
      %v1640 = vsel %vm1617, %v1607, %v1050
      %v1641 = vsel %vm1617, %v1608, %v1052
      %v1642 = vsel %vm1617, %v1609, %v1054
      %v1643 = vsel %vm1617, %v1610, %v1056
      %v1644 = vsel %vm1617, %v1611, %v1058
      %v1645 = vsel %vm1617, %v1612, %v1060
      %v1646 = vsel %vm1617, %v1613, %v1062
      %v1647 = vsel %vm1617, %v1614, %v1064
      %v1648 = vsel %vm1617, %v1615, %v1066
      %v1649 = vsel %vm1617, %v1616, %v1068
      %vm1650 = vcmask 195584
      %v1651 = vsel %vm1650, %v1618, %v1134
      %v1652 = vsel %vm1650, %v1619, %v1136
      %v1653 = vsel %vm1650, %v1620, %v1138
      %v1654 = vsel %vm1650, %v1621, %v1140
      %v1655 = vsel %vm1650, %v1622, %v1142
      %v1656 = vsel %vm1650, %v1623, %v1144
      %v1657 = vsel %vm1650, %v1624, %v1146
      %v1658 = vsel %vm1650, %v1625, %v1148
      %v1659 = vsel %vm1650, %v1626, %v1150
      %v1660 = vsel %vm1650, %v1627, %v1152
      %v1661 = vsel %vm1650, %v1628, %v1154
      %v1662 = vsel %vm1650, %v1629, %v1156
      %v1663 = vsel %vm1650, %v1630, %v1158
      %v1664 = vsel %vm1650, %v1631, %v1160
      %v1665 = vsel %vm1650, %v1632, %v1162
      %v1666 = vsel %vm1650, %v1633, %v1164
      %v1667 = vsel %vm1650, %v1634, %v1166
      %v1668 = vsel %vm1650, %v1635, %v1168
      %v1669 = vsel %vm1650, %v1636, %v1170
      %v1670 = vsel %vm1650, %v1637, %v1172
      %v1671 = vsel %vm1650, %v1638, %v1174
      %v1672 = vsel %vm1650, %v1639, %v1176
      %v1673 = vsel %vm1650, %v1640, %v1178
      %v1674 = vsel %vm1650, %v1641, %v1180
      %v1675 = vsel %vm1650, %v1642, %v1182
      %v1676 = vsel %vm1650, %v1643, %v1184
      %v1677 = vsel %vm1650, %v1644, %v1186
      %v1678 = vsel %vm1650, %v1645, %v1188
      %v1679 = vsel %vm1650, %v1646, %v1190
      %v1680 = vsel %vm1650, %v1647, %v1192
      %v1681 = vsel %vm1650, %v1648, %v1194
      %v1682 = vsel %vm1650, %v1649, %v1196
      %vm1683 = vcmask 228352
      %v1684 = vsel %vm1683, %v1651, %v1262
      %v1685 = vsel %vm1683, %v1652, %v1264
      %v1686 = vsel %vm1683, %v1653, %v1266
      %v1687 = vsel %vm1683, %v1654, %v1268
      %v1688 = vsel %vm1683, %v1655, %v1270
      %v1689 = vsel %vm1683, %v1656, %v1272
      %v1690 = vsel %vm1683, %v1657, %v1274
      %v1691 = vsel %vm1683, %v1658, %v1276
      %v1692 = vsel %vm1683, %v1659, %v1278
      %v1693 = vsel %vm1683, %v1660, %v1280
      %v1694 = vsel %vm1683, %v1661, %v1282
      %v1695 = vsel %vm1683, %v1662, %v1284
      %v1696 = vsel %vm1683, %v1663, %v1286
      %v1697 = vsel %vm1683, %v1664, %v1288
      %v1698 = vsel %vm1683, %v1665, %v1290
      %v1699 = vsel %vm1683, %v1666, %v1292
      %v1700 = vsel %vm1683, %v1667, %v1294
      %v1701 = vsel %vm1683, %v1668, %v1296
      %v1702 = vsel %vm1683, %v1669, %v1298
      %v1703 = vsel %vm1683, %v1670, %v1300
      %v1704 = vsel %vm1683, %v1671, %v1302
      %v1705 = vsel %vm1683, %v1672, %v1304
      %v1706 = vsel %vm1683, %v1673, %v1306
      %v1707 = vsel %vm1683, %v1674, %v1308
      %v1708 = vsel %vm1683, %v1675, %v1310
      %v1709 = vsel %vm1683, %v1676, %v1312
      %v1710 = vsel %vm1683, %v1677, %v1314
      %v1711 = vsel %vm1683, %v1678, %v1316
      %v1712 = vsel %vm1683, %v1679, %v1318
      %v1713 = vsel %vm1683, %v1680, %v1320
      %v1714 = vsel %vm1683, %v1681, %v1322
      %v1715 = vsel %vm1683, %v1682, %v1324
      %vm1716 = vcmask 261120
      %v1717 = vsel %vm1716, %v1684, %v1390
      %v1718 = vsel %vm1716, %v1685, %v1392
      %v1719 = vsel %vm1716, %v1686, %v1394
      %v1720 = vsel %vm1716, %v1687, %v1396
      %v1721 = vsel %vm1716, %v1688, %v1398
      %v1722 = vsel %vm1716, %v1689, %v1400
      %v1723 = vsel %vm1716, %v1690, %v1402
      %v1724 = vsel %vm1716, %v1691, %v1404
      %v1725 = vsel %vm1716, %v1692, %v1406
      %v1726 = vsel %vm1716, %v1693, %v1408
      %v1727 = vsel %vm1716, %v1694, %v1410
      %v1728 = vsel %vm1716, %v1695, %v1412
      %v1729 = vsel %vm1716, %v1696, %v1414
      %v1730 = vsel %vm1716, %v1697, %v1416
      %v1731 = vsel %vm1716, %v1698, %v1418
      %v1732 = vsel %vm1716, %v1699, %v1420
      %v1733 = vsel %vm1716, %v1700, %v1422
      %v1734 = vsel %vm1716, %v1701, %v1424
      %v1735 = vsel %vm1716, %v1702, %v1426
      %v1736 = vsel %vm1716, %v1703, %v1428
      %v1737 = vsel %vm1716, %v1704, %v1430
      %v1738 = vsel %vm1716, %v1705, %v1432
      %v1739 = vsel %vm1716, %v1706, %v1434
      %v1740 = vsel %vm1716, %v1707, %v1436
      %v1741 = vsel %vm1716, %v1708, %v1438
      %v1742 = vsel %vm1716, %v1709, %v1440
      %v1743 = vsel %vm1716, %v1710, %v1442
      %v1744 = vsel %vm1716, %v1711, %v1444
      %v1745 = vsel %vm1716, %v1712, %v1446
      %v1746 = vsel %vm1716, %v1713, %v1448
      %v1747 = vsel %vm1716, %v1714, %v1450
      %v1748 = vsel %vm1716, %v1715, %v1452
      %v1749 = vld [vmem:[%s1] sm:$0xff]
      %v1750 = vld [vmem:[%s1 + $0x8] sm:$0xff]
      %v1751 = vld [vmem:[%s1 + $0x10] sm:$0xff]
      %v1752 = vld [vmem:[%s1 + $0x18] sm:$0xff]
      %v1753 = vld [vmem:[%s1 + $0x20] sm:$0xf]
      %v1754 = vld [vmem:[%s2] sm:$0x1]
      %v1756 = vlaneseq
      %v1757 = vshrl.u32 %v1756, 7
      %v1758 = vsub.s32 0, %v1757
      %v1759 = vrot.slane %v1754, %v1758
      %vm1761 = vcmask 293888
      %v1763 = vsel %vm1761, %v1717, 0
      %v1766 = vsel %vm1761, %v1718, 0
      %v1769 = vsel %vm1761, %v1719, 0
      %v1772 = vsel %vm1761, %v1720, 0
      %v1775 = vsel %vm1761, %v1721, 0
      %v1778 = vsel %vm1761, %v1722, 0
      %v1781 = vsel %vm1761, %v1723, 0
      %v1784 = vsel %vm1761, %v1724, 0
      %v1787 = vsel %vm1761, %v1725, 0
      %v1790 = vsel %vm1761, %v1726, 0
      %v1793 = vsel %vm1761, %v1727, 0
      %v1796 = vsel %vm1761, %v1728, 0
      %v1799 = vsel %vm1761, %v1729, 0
      %v1802 = vsel %vm1761, %v1730, 0
      %v1805 = vsel %vm1761, %v1731, 0
      %v1808 = vsel %vm1761, %v1732, 0
      %v1811 = vsel %vm1761, %v1733, 0
      %v1814 = vsel %vm1761, %v1734, 0
      %v1817 = vsel %vm1761, %v1735, 0
      %v1820 = vsel %vm1761, %v1736, 0
      %v1823 = vsel %vm1761, %v1737, 0
      %v1826 = vsel %vm1761, %v1738, 0
      %v1829 = vsel %vm1761, %v1739, 0
      %v1832 = vsel %vm1761, %v1740, 0
      %v1835 = vsel %vm1761, %v1741, 0
      %v1838 = vsel %vm1761, %v1742, 0
      %v1841 = vsel %vm1761, %v1743, 0
      %v1844 = vsel %vm1761, %v1744, 0
      %v1847 = vsel %vm1761, %v1745, 0
      %v1850 = vsel %vm1761, %v1746, 0
      %v1853 = vsel %vm1761, %v1747, 0
      %v1856 = vsel %vm1761, %v1748, 0
      %vm1858 = vcmask 1043456
      %v1860 = vsel %vm1858, %v1753, 0
      %1862 = vmatprep.subr.mxu0 0.0
      %1863 = vmatpush1.msra.mxu0 %v1749
      %1864 = vmatprep.subr.mxu0 0.0
      %1865 = vmatpush1.msra.mxu0 %v1750
      %1866 = vmatprep.subr.mxu0 0.0
      %1867 = vmatpush1.msra.mxu0 %v1751
      %1868 = vmatprep.subr.mxu0 0.0
      %1869 = vmatpush1.msra.mxu0 %v1752
      %1870 = vmatprep.subr.mxu0 0.0
      %1871 = vmatpush1.msra.mxu0 %v1860
      %1872 = vmatprep.subr.mxu0 0.0
      %1873 = vmatpush1.msra.mxu0 0.0
      %1874 = vmatprep.subr.mxu0 0.0
      %1875 = vmatpush1.msra.mxu0 0.0
      %1876 = vmatprep.subr.mxu0 0.0
      %1877 = vmatpush1.msra.mxu0 0.0
      %1878 = vmatprep.subr.mxu0 0.0
      %1879 = vmatpush1.msra.mxu0 0.0
      %1880 = vmatprep.subr.mxu0 0.0
      %1881 = vmatpush1.msra.mxu0 0.0
      %1882 = vmatprep.subr.mxu0 0.0
      %1883 = vmatpush1.msra.mxu0 0.0
      %1884 = vmatprep.subr.mxu0 0.0
      %1885 = vmatpush1.msra.mxu0 0.0
      %1886 = vmatprep.subr.mxu0 0.0
      %1887 = vmatpush1.msra.mxu0 0.0
      %1888 = vmatprep.subr.mxu0 0.0
      %1889 = vmatpush1.msra.mxu0 0.0
      %1890 = vmatprep.subr.mxu0 0.0
      %1891 = vmatpush1.msra.mxu0 0.0
      %1892 = vmatprep.subr.mxu0 0.0
      %1893 = vmatpush1.msra.mxu0 0.0
      %1894 = vmatprep.subr.mxu0 0.0
      %1895 = vmatpush1.msra.mxu0 0.0
      %1896 = vmatprep.subr.mxu0 0.0
      %1897 = vmatpush1.msra.mxu0 0.0
      %1898 = vmatprep.subr.mxu0 0.0
      %1899 = vmatpush1.msra.mxu0 0.0
      %1900 = vmatprep.subr.mxu0 0.0
      %1901 = vmatpush1.msra.mxu0 0.0
      %1902 = vmatprep.subr.mxu0 0.0
      %1903 = vmatpush1.msra.mxu0 0.0
      %1904 = vmatprep.subr.mxu0 0.0
      %1905 = vmatpush1.msra.mxu0 0.0
      %1906 = vmatprep.subr.mxu0 0.0
      %1907 = vmatpush1.msra.mxu0 0.0
      %1908 = vmatprep.subr.mxu0 0.0
      %1909 = vmatpush1.msra.mxu0 0.0
      %1910 = vmatprep.subr.mxu0 0.0
      %1911 = vmatpush1.msra.mxu0 0.0
      %1912 = vmatprep.subr.mxu0 0.0
      %1913 = vmatpush1.msra.mxu0 0.0
      %1914 = vmatprep.subr.mxu0 0.0
      %1915 = vmatpush1.msra.mxu0 0.0
      %1916 = vmatprep.subr.mxu0 0.0
      %1917 = vmatpush1.msra.mxu0 0.0
      %1918 = vmatprep.subr.mxu0 0.0
      %1919 = vmatpush1.msra.mxu0 0.0
      %1920 = vmatprep.subr.mxu0 0.0
      %1921 = vmatpush1.msra.mxu0 0.0
      %1922 = vmatprep.subr.mxu0 0.0
      %1923 = vmatpush1.msra.mxu0 0.0
      %1924 = vmatprep.subr.mxu0 0.0
      %1925 = vmatpush1.msra.mxu0 0.0
      %1926 = vmatprep.mubr.f32.mxu0 0.0
      %1927 = vmatmul.mubr.f32.gmra.mrb[0].mxu0 %v1763
      %v1928 = vpop.f32.mrb[0].mxu0
      %v1929 = vadd.f32 %v1759, %v1928
      %v1930 = vpop.f32.mrb[0].mxu0
      %1931 = vmatprep.mubr.f32.mxu0 0.0
      %1932 = vmatmul.mubr.f32.gmra.mrb[0].mxu0 %v1766
      %v1933 = vpop.f32.mrb[0].mxu0
      %v1934 = vadd.f32 %v1759, %v1933
      %v1935 = vpop.f32.mrb[0].mxu0
      %1936 = vmatprep.mubr.f32.mxu0 0.0
      %1937 = vmatmul.mubr.f32.gmra.mrb[0].mxu0 %v1769
      %v1938 = vpop.f32.mrb[0].mxu0
      %v1939 = vadd.f32 %v1759, %v1938
      %v1940 = vpop.f32.mrb[0].mxu0
      %1941 = vmatprep.mubr.f32.mxu0 0.0
      %1942 = vmatmul.mubr.f32.gmra.mrb[0].mxu0 %v1772
      %v1943 = vpop.f32.mrb[0].mxu0
      %v1944 = vadd.f32 %v1759, %v1943
      %v1945 = vpop.f32.mrb[0].mxu0
      %1946 = vmatprep.mubr.f32.mxu0 0.0
      %1947 = vmatmul.mubr.f32.gmra.mrb[0].mxu0 %v1775
      %v1948 = vpop.f32.mrb[0].mxu0
      %v1949 = vadd.f32 %v1759, %v1948
      %v1950 = vpop.f32.mrb[0].mxu0
      %1951 = vmatprep.mubr.f32.mxu0 0.0
      %1952 = vmatmul.mubr.f32.gmra.mrb[0].mxu0 %v1778
      %v1953 = vpop.f32.mrb[0].mxu0
      %v1954 = vadd.f32 %v1759, %v1953
      %v1955 = vpop.f32.mrb[0].mxu0
      %1956 = vmatprep.mubr.f32.mxu0 0.0
      %1957 = vmatmul.mubr.f32.gmra.mrb[0].mxu0 %v1781
      %v1958 = vpop.f32.mrb[0].mxu0
      %v1959 = vadd.f32 %v1759, %v1958
      %v1960 = vpop.f32.mrb[0].mxu0
      %1961 = vmatprep.mubr.f32.mxu0 0.0
      %1962 = vmatmul.mubr.f32.gmra.mrb[0].mxu0 %v1784
      %v1963 = vpop.f32.mrb[0].mxu0
      %v1964 = vadd.f32 %v1759, %v1963
      %v1965 = vpop.f32.mrb[0].mxu0
      %1966 = vmatprep.mubr.f32.mxu0 0.0
      %1967 = vmatmul.mubr.f32.gmra.mrb[0].mxu0 %v1787
      %v1968 = vpop.f32.mrb[0].mxu0
      %v1969 = vadd.f32 %v1759, %v1968
      %v1970 = vpop.f32.mrb[0].mxu0
      %1971 = vmatprep.mubr.f32.mxu0 0.0
      %1972 = vmatmul.mubr.f32.gmra.mrb[0].mxu0 %v1790
      %v1973 = vpop.f32.mrb[0].mxu0
      %v1974 = vadd.f32 %v1759, %v1973
      %v1975 = vpop.f32.mrb[0].mxu0
      %1976 = vmatprep.mubr.f32.mxu0 0.0
      %1977 = vmatmul.mubr.f32.gmra.mrb[0].mxu0 %v1793
      %v1978 = vpop.f32.mrb[0].mxu0
      %v1979 = vadd.f32 %v1759, %v1978
      %v1980 = vpop.f32.mrb[0].mxu0
      %1981 = vmatprep.mubr.f32.mxu0 0.0
      %1982 = vmatmul.mubr.f32.gmra.mrb[0].mxu0 %v1796
      %v1983 = vpop.f32.mrb[0].mxu0
      %v1984 = vadd.f32 %v1759, %v1983
      %v1985 = vpop.f32.mrb[0].mxu0
      %1986 = vmatprep.mubr.f32.mxu0 0.0
      %1987 = vmatmul.mubr.f32.gmra.mrb[0].mxu0 %v1799
      %v1988 = vpop.f32.mrb[0].mxu0
      %v1989 = vadd.f32 %v1759, %v1988
      %v1990 = vpop.f32.mrb[0].mxu0
      %1991 = vmatprep.mubr.f32.mxu0 0.0
      %1992 = vmatmul.mubr.f32.gmra.mrb[0].mxu0 %v1802
      %v1993 = vpop.f32.mrb[0].mxu0
      %v1994 = vadd.f32 %v1759, %v1993
      %v1995 = vpop.f32.mrb[0].mxu0
      %1996 = vmatprep.mubr.f32.mxu0 0.0
      %1997 = vmatmul.mubr.f32.gmra.mrb[0].mxu0 %v1805
      %v1998 = vpop.f32.mrb[0].mxu0
      %v1999 = vadd.f32 %v1759, %v1998
      %v2000 = vpop.f32.mrb[0].mxu0
      %2001 = vmatprep.mubr.f32.mxu0 0.0
      %2002 = vmatmul.mubr.f32.gmra.mrb[0].mxu0 %v1808
      %v2003 = vpop.f32.mrb[0].mxu0
      %v2004 = vadd.f32 %v1759, %v2003
      %v2005 = vpop.f32.mrb[0].mxu0
      %2006 = vmatprep.mubr.f32.mxu0 0.0
      %2007 = vmatmul.mubr.f32.gmra.mrb[0].mxu0 %v1811
      %v2008 = vpop.f32.mrb[0].mxu0
      %v2009 = vadd.f32 %v1759, %v2008
      %v2010 = vpop.f32.mrb[0].mxu0
      %2011 = vmatprep.mubr.f32.mxu0 0.0
      %2012 = vmatmul.mubr.f32.gmra.mrb[0].mxu0 %v1814
      %v2013 = vpop.f32.mrb[0].mxu0
      %v2014 = vadd.f32 %v1759, %v2013
      %v2015 = vpop.f32.mrb[0].mxu0
      %2016 = vmatprep.mubr.f32.mxu0 0.0
      %2017 = vmatmul.mubr.f32.gmra.mrb[0].mxu0 %v1817
      %v2018 = vpop.f32.mrb[0].mxu0
      %v2019 = vadd.f32 %v1759, %v2018
      %v2020 = vpop.f32.mrb[0].mxu0
      %2021 = vmatprep.mubr.f32.mxu0 0.0
      %2022 = vmatmul.mubr.f32.gmra.mrb[0].mxu0 %v1820
      %v2023 = vpop.f32.mrb[0].mxu0
      %v2024 = vadd.f32 %v1759, %v2023
      %v2025 = vpop.f32.mrb[0].mxu0
      %2026 = vmatprep.mubr.f32.mxu0 0.0
      %2027 = vmatmul.mubr.f32.gmra.mrb[0].mxu0 %v1823
      %v2028 = vpop.f32.mrb[0].mxu0
      %v2029 = vadd.f32 %v1759, %v2028
      %v2030 = vpop.f32.mrb[0].mxu0
      %2031 = vmatprep.mubr.f32.mxu0 0.0
      %2032 = vmatmul.mubr.f32.gmra.mrb[0].mxu0 %v1826
      %v2033 = vpop.f32.mrb[0].mxu0
      %v2034 = vadd.f32 %v1759, %v2033
      %v2035 = vpop.f32.mrb[0].mxu0
      %2036 = vmatprep.mubr.f32.mxu0 0.0
      %2037 = vmatmul.mubr.f32.gmra.mrb[0].mxu0 %v1829
      %v2038 = vpop.f32.mrb[0].mxu0
      %v2039 = vadd.f32 %v1759, %v2038
      %v2040 = vpop.f32.mrb[0].mxu0
      %2041 = vmatprep.mubr.f32.mxu0 0.0
      %2042 = vmatmul.mubr.f32.gmra.mrb[0].mxu0 %v1832
      %v2043 = vpop.f32.mrb[0].mxu0
      %v2044 = vadd.f32 %v1759, %v2043
      %v2045 = vpop.f32.mrb[0].mxu0
      %2046 = vmatprep.mubr.f32.mxu0 0.0
      %2047 = vmatmul.mubr.f32.gmra.mrb[0].mxu0 %v1835
      %v2048 = vpop.f32.mrb[0].mxu0
      %v2049 = vadd.f32 %v1759, %v2048
      %v2050 = vpop.f32.mrb[0].mxu0
      %2051 = vmatprep.mubr.f32.mxu0 0.0
      %2052 = vmatmul.mubr.f32.gmra.mrb[0].mxu0 %v1838
      %v2053 = vpop.f32.mrb[0].mxu0
      %v2054 = vadd.f32 %v1759, %v2053
      %v2055 = vpop.f32.mrb[0].mxu0
      %2056 = vmatprep.mubr.f32.mxu0 0.0
      %2057 = vmatmul.mubr.f32.gmra.mrb[0].mxu0 %v1841
      %v2058 = vpop.f32.mrb[0].mxu0
      %v2059 = vadd.f32 %v1759, %v2058
      %v2060 = vpop.f32.mrb[0].mxu0
      %2061 = vmatprep.mubr.f32.mxu0 0.0
      %2062 = vmatmul.mubr.f32.gmra.mrb[0].mxu0 %v1844
      %v2063 = vpop.f32.mrb[0].mxu0
      %v2064 = vadd.f32 %v1759, %v2063
      %v2065 = vpop.f32.mrb[0].mxu0
      %2066 = vmatprep.mubr.f32.mxu0 0.0
      %2067 = vmatmul.mubr.f32.gmra.mrb[0].mxu0 %v1847
      %v2068 = vpop.f32.mrb[0].mxu0
      %v2069 = vadd.f32 %v1759, %v2068
      %v2070 = vpop.f32.mrb[0].mxu0
      %2071 = vmatprep.mubr.f32.mxu0 0.0
      %2072 = vmatmul.mubr.f32.gmra.mrb[0].mxu0 %v1850
      %v2073 = vpop.f32.mrb[0].mxu0
      %v2074 = vadd.f32 %v1759, %v2073
      %v2075 = vpop.f32.mrb[0].mxu0
      %2076 = vmatprep.mubr.f32.mxu0 0.0
      %2077 = vmatmul.mubr.f32.gmra.mrb[0].mxu0 %v1853
      %v2078 = vpop.f32.mrb[0].mxu0
      %v2079 = vadd.f32 %v1759, %v2078
      %v2080 = vpop.f32.mrb[0].mxu0
      %2081 = vmatprep.mubr.f32.mxu0 0.0
      %2082 = vmatmul.mubr.f32.gmra.mrb[0].mxu0 %v1856
      %v2083 = vpop.f32.mrb[0].mxu0
      %v2084 = vadd.f32 %v1759, %v2083
      %v2085 = vpop.f32.mrb[0].mxu0
      %2086 = vdwg.mxu0
      %2087 = vst [vmem:[%s170] sm:$0xff] %v1929
      %2088 = vst [vmem:[%s170 + $0x8] sm:$0xff] %v1934
      %2089 = vst [vmem:[%s170 + $0x10] sm:$0xff] %v1939
      %2090 = vst [vmem:[%s170 + $0x18] sm:$0xff] %v1944
      %2091 = vst [vmem:[%s170 + $0x20] sm:$0xff] %v1949
      %2092 = vst [vmem:[%s170 + $0x28] sm:$0xff] %v1954
      %2093 = vst [vmem:[%s170 + $0x30] sm:$0xff] %v1959
      %2094 = vst [vmem:[%s170 + $0x38] sm:$0xff] %v1964
      %2095 = vst [vmem:[%s170 + $0x40] sm:$0xff] %v1969
      %2096 = vst [vmem:[%s170 + $0x48] sm:$0xff] %v1974
      %2097 = vst [vmem:[%s170 + $0x50] sm:$0xff] %v1979
      %2098 = vst [vmem:[%s170 + $0x58] sm:$0xff] %v1984
      %2099 = vst [vmem:[%s170 + $0x60] sm:$0xff] %v1989
      %2100 = vst [vmem:[%s170 + $0x68] sm:$0xff] %v1994
      %2101 = vst [vmem:[%s170 + $0x70] sm:$0xff] %v1999
      %2102 = vst [vmem:[%s170 + $0x78] sm:$0xff] %v2004
      %2103 = vst [vmem:[%s170 + $0x80] sm:$0xff] %v2009
      %2104 = vst [vmem:[%s170 + $0x88] sm:$0xff] %v2014
      %2105 = vst [vmem:[%s170 + $0x90] sm:$0xff] %v2019
      %2106 = vst [vmem:[%s170 + $0x98] sm:$0xff] %v2024
      %2107 = vst [vmem:[%s170 + $0xa0] sm:$0xff] %v2029
      %2108 = vst [vmem:[%s170 + $0xa8] sm:$0xff] %v2034
      %2109 = vst [vmem:[%s170 + $0xb0] sm:$0xff] %v2039
      %2110 = vst [vmem:[%s170 + $0xb8] sm:$0xff] %v2044
      %2111 = vst [vmem:[%s170 + $0xc0] sm:$0xff] %v2049
      %2112 = vst [vmem:[%s170 + $0xc8] sm:$0xff] %v2054
      %2113 = vst [vmem:[%s170 + $0xd0] sm:$0xff] %v2059
      %2114 = vst [vmem:[%s170 + $0xd8] sm:$0xff] %v2064
      %2115 = vst [vmem:[%s170 + $0xe0] sm:$0xff] %v2069
      %2116 = vst [vmem:[%s170 + $0xe8] sm:$0xff] %v2074
      %2117 = vst [vmem:[%s170 + $0xf0] sm:$0xff] %v2079
      %2118 = vst [vmem:[%s170 + $0xf8] sm:$0xff] %v2084
      %p2119 = scmp.lt.s32.totalorder %s14, 1
      %s2120 = scalar_select %p2119, %s14, 1
      %s2121 = smul.addr %s2120, 32
      %s2122 = smul.addr %s2121, 8
      %s2123 = scalar_lea.vmem %s3, %s2122
      // Predicated region
      $region33: #{dconv2d_forward.1} parent=31 // pred_check
        %p2124 = pneg %p100
      $region34: #{dconv2d_forward.1} parent=31 // pred_check_branch
        %2126 = sbr.rel (%p2124) target = $region36
      $region35: #{dconv2d_forward.1} parent=31 // pred_region
        _
      $region36: #{dconv2d_forward.1} parent=31 // pred_fallthru
        _
    $region32: #{dconv2d_forward.1} parent=5 // pred_fallthru
      _
    %p2127 = scmp.le.s32.totalorder 2, %s9
    // Predicated region
    $region37: #{dconv2d_forward.1} parent=5 // pred_check
      %p2128 = pneg %p2127
    $region38: #{dconv2d_forward.1} parent=5 // pred_check_branch
      %2130 = sbr.rel (%p2128) target = $region40
    $region39: #{dconv2d_forward.1} parent=5 // pred_region
      %s2131 = ssub.s32 %s9, 2
      // Predicated region
      $region41: #{dconv2d_forward.1} parent=39 // pred_check
        %p2132 = pneg %p106
      $region42: #{dconv2d_forward.1} parent=39 // pred_check_branch
        %2134 = sbr.rel (%p2132) target = $region44
      $region43: #{dconv2d_forward.1} parent=39 // pred_region
        %p2135 = scmp.lt.s32.totalorder %s15, 1
        %s2136 = scalar_select %p2135, %s15, 1
        %s2137 = smul.addr %s2136, 32
        %s2138 = smul.addr %s2137, 8
        %s2139 = scalar_lea.vmem %s3, %s2138
      $region44: #{dconv2d_forward.1} parent=39 // pred_fallthru
        _
    $region40: #{dconv2d_forward.1} parent=5 // pred_fallthru
      _
  $region6: #{dconv2d_forward.1} parent=0 // loop_footer
    %s13 = sadd.s32 1, %s9
  $region7: #{dconv2d_forward.1} parent=0 // loop_footer_branch
    %8 = sbr.rel target = $region3
  $region8: #{dconv2d_forward.1} parent=0 // loop_exit
    _

</llo_original>
